<compile_context>
chip_gen: v7x
topology: tpu7x:2x2x1
jax: 0.10.0
libtpu: 0.0.40
codegen_flags: <defaults>
</compile_context>

<pallas_src>
import functools

import jax
import jax.numpy as jnp
import numpy as np
from jax.experimental import pallas as pl
from jax.experimental.pallas import tpu as pltpu


def _tap_masks(H, W):
    """(9, H*W) f32 {0,1} validity mask for each 3x3 tap (implements zero padding)."""
    y, x = np.mgrid[0:H, 0:W]
    rows = []
    for dy in (-1, 0, 1):
        for dx in (-1, 0, 1):
            valid = (y + dy >= 0) & (y + dy < H) & (x + dx >= 0) & (x + dx < W)
            rows.append(valid.reshape(-1))
    return np.stack(rows).astype(np.float32)


def _pick_block_batch(B, bytes_per_image, *, min_grid_steps=2,
                      vmem_budget_bytes=8 << 20, max_unroll=8):
    """Largest divisor of B (capped at max_unroll) that keeps >= min_grid_steps grid
    steps (so v7x's two TensorCores both stay busy on the 'parallel' axis) and keeps
    the double-buffered x/out blocks inside the VMEM budget."""
    best = 1
    for bt in range(1, min(B, max_unroll) + 1):
        if B % bt:
            continue
        if B >= min_grid_steps and (B // bt) < min_grid_steps:
            continue
        if 2 * bt * bytes_per_image > vmem_budget_bytes:
            continue
        best = bt
    return best


def _residual_kernel(x_ref, w3_ref, w1_ref, m_ref, o_ref, *, H, W, block_batch):
    # x_ref : (Bt, Cin, HW)   block of images; channels in sublanes, flat spatial in lanes
    # w3_ref: (9, Cres, Cin)  3x3 weights, one (Cres, Cin) tile per tap (tap = ky*3+kx)
    # w1_ref: (Cout, Cres)    1x1 conv weights, transposed
    # m_ref : (9, HW)         per-tap boundary masks (0/1), implement SAME zero padding
    # o_ref : (Bt, Cout, HW)  output block (Cout == Cin)
    HW = H * W
    Cin = x_ref.shape[1]

    w3 = w3_ref[...].astype(jnp.float32)      # (9, Cres, Cin) -- loaded once per step
    w1 = w1_ref[...].astype(jnp.float32)      # (Cout, Cres)
    masks = m_ref[...].astype(jnp.float32)    # (9, HW)

    # Small static unroll over the images in this block (block_batch is kept <= 8).
    for b in range(block_batch):
        x = x_ref[b].astype(jnp.float32)      # (Cin, HW)
        a = jnp.maximum(x, 0.0)               # ReLU #1 (lane dense)

        # 3x3 conv as 9 accumulated per-tap MXU dots -- no im2col buffer.
        acc = None
        for ky in range(3):
            for kx in range(3):
                tap = ky * 3 + kx
                s = (ky - 1) * W + (kx - 1)   # flat-spatial offset of this tap
                t = a if s == 0 else pltpu.roll(a, shift=(-s) % HW, axis=1)
                if tap != 4:                  # center tap mask is all-ones: skip it
                    t = t * masks[tap:tap + 1, :]
                part = jnp.dot(w3[tap], t, preferred_element_type=jnp.float32)  # (Cres, HW)
                acc = part if acc is None else acc + part

        hidden = jnp.maximum(acc, 0.0)        # ReLU #2 (lane dense)

        # 1x1 conv == matmul, output kept channels-in-sublanes / spatial-in-lanes.
        y = jnp.dot(w1, hidden, preferred_element_type=jnp.float32)             # (Cout, HW)

        o_ref[b] = (x + y).astype(o_ref.dtype)  # residual add (lane dense, unmasked vst)


def residual_layer(x_nchw, w3, w1):
    """x_nchw: (B, Cin, H, W); w3: (3,3,Cin,Cres) HWIO; w1: (Cres, Cout), Cout == Cin."""
    B, Cin, H, W = x_nchw.shape
    Cres = w3.shape[3]
    Cout = w1.shape[1]
    assert Cout == Cin, "residual add requires h_dim == in_dim"
    HW = H * W

    # Free view (contiguous trailing dims) -- no transpose / pad / extra HBM pass.
    x_flat = x_nchw.reshape(B, Cin, HW)

    # Tiny weight repacks (a few KiB each).
    #   HWIO (3,3,Cin,Cres) -> (9, Cres, Cin): one lane-aligned weight tile per tap.
    w3_pack = jnp.transpose(w3.reshape(9, Cin, Cres), (0, 2, 1))
    w1_t = jnp.transpose(w1, (1, 0))                          # (Cout, Cres)
    masks = jnp.asarray(_tap_masks(H, W))                     # (9, HW)

    itemsize = jnp.dtype(x_nchw.dtype).itemsize
    bytes_per_image = (Cin + Cout) * HW * itemsize
    block_batch = _pick_block_batch(B, bytes_per_image)
    assert B % block_batch == 0
    n_steps = B // block_batch

    # Explicit VMEM limit (review: v7x has 64 MiB physical / 32 MiB default scoped).
    block_bytes = 2 * 2 * block_batch * (Cin + Cout) * HW * itemsize   # double-buffered x/out
    fixed_bytes = (9 * Cres * Cin + Cout * Cres + 9 * HW) * 4          # weights + masks
    vmem_limit_bytes = int(min(max(4 * (block_bytes + fixed_bytes), 16 << 20), 48 << 20))

    kernel = functools.partial(_residual_kernel, H=H, W=W, block_batch=block_batch)

    out_flat = pl.pallas_call(
        kernel,
        out_shape=jax.ShapeDtypeStruct((B, Cout, HW), x_nchw.dtype),
        grid_spec=pltpu.PrefetchScalarGridSpec(
            num_scalar_prefetch=0,
            grid=(n_steps,),
            in_specs=[
                pl.BlockSpec((block_batch, Cin, HW), lambda g: (g, 0, 0)),
                pl.BlockSpec((9, Cres, Cin), lambda g: (0, 0, 0)),
                pl.BlockSpec((Cout, Cres), lambda g: (0, 0)),
                pl.BlockSpec((9, HW), lambda g: (0, 0)),
            ],
            out_specs=pl.BlockSpec((block_batch, Cout, HW), lambda g: (g, 0, 0)),
        ),
        compiler_params=pltpu.CompilerParams(
            dimension_semantics=("parallel",),
            vmem_limit_bytes=vmem_limit_bytes),
    )(x_flat, w3_pack, w1_t, masks)

    return out_flat.reshape(B, Cout, H, W)


def residual_layer_ref(x_nchw, w3, w1):
    """Pure-JAX reference (matches the PyTorch forward)."""
    x = jnp.transpose(x_nchw, (0, 2, 3, 1)).astype(jnp.float32)
    a = jax.nn.relu(x)
    c = jax.lax.conv_general_dilated(
        a, w3, window_strides=(1, 1), padding="SAME",
        dimension_numbers=("NHWC", "HWIO", "NHWC"))
    b = jax.nn.relu(c)
    y = jnp.einsum("bhwc,cd->bhwd", b, w1)
    return jnp.transpose(x + y, (0, 3, 1, 2)).astype(x_nchw.dtype)


if __name__ == "__main__":
    # Module hyper-params (small, synthetic):
    in_dim = 32      # == h_dim so the residual add is well-defined
    h_dim = 32
    res_h_dim = 16
    B, H, W = 2, 16, 16

    key = jax.random.PRNGKey(0)
    kx, k3, k1 = jax.random.split(key, 3)

    x = jax.random.normal(kx, (B, in_dim, H, W), dtype=jnp.float32)      # NCHW
    # Deterministic weights (HWIO for the 3x3; (in,out) for the 1x1), no bias.
    w3 = 0.1 * jax.random.normal(k3, (3, 3, in_dim, res_h_dim), dtype=jnp.float32)
    w1 = 0.1 * jax.random.normal(k1, (res_h_dim, h_dim), dtype=jnp.float32)

    out = jax.block_until_ready(residual_layer(x, w3, w1))
    ref = jax.block_until_ready(residual_layer_ref(x, w3, w1))

    assert out.shape == (B, h_dim, H, W), out.shape
    assert jnp.allclose(out, ref, atol=1e-4, rtol=1e-4), (
        float(jnp.max(jnp.abs(out - ref))))

    print("KERNEL_OK")
</pallas_src>

<mosaic_0001>
module attributes {stable_mosaic.version = 11 : i64} {
  func.func @_residual_kernel(%arg0: i32, %arg1: memref<1x32x256xf32, #tpu.memory_space<vmem>>, %arg2: memref<9x16x32xf32, #tpu.memory_space<vmem>>, %arg3: memref<32x16xf32, #tpu.memory_space<vmem>>, %arg4: memref<9x256xf32, #tpu.memory_space<vmem>>, %arg5: memref<1x32x256xf32, #tpu.memory_space<vmem>>) attributes {dimension_semantics = [#tpu.dimension_semantics<parallel>], iteration_bounds = array<i64: 2>, scalar_prefetch = 0 : i64, scratch_operands = 0 : i64, tpu.core_type = #tpu.core_type<tc>, window_params = [{transform_indices = @transform_0, window_bounds = array<i64: 1, 32, 256>}, {pipeline_mode = #tpu.pipeline_mode<synchronous>, transform_indices = @transform_1, window_bounds = array<i64: 9, 16, 32>}, {pipeline_mode = #tpu.pipeline_mode<synchronous>, transform_indices = @transform_2, window_bounds = array<i64: 32, 16>}, {pipeline_mode = #tpu.pipeline_mode<synchronous>, transform_indices = @transform_3, window_bounds = array<i64: 9, 256>}, {transform_indices = @transform_4, window_bounds = array<i64: 1, 32, 256>}]} {
    %c0 = arith.constant 0 : index
    %c0_0 = arith.constant 0 : index
    %c0_1 = arith.constant 0 : index
    %0 = vector.load %arg2[%c0, %c0_0, %c0_1] : memref<9x16x32xf32, #tpu.memory_space<vmem>>, vector<9x16x32xf32>
    %c0_2 = arith.constant 0 : index
    %c0_3 = arith.constant 0 : index
    %1 = vector.load %arg3[%c0_2, %c0_3] : memref<32x16xf32, #tpu.memory_space<vmem>>, vector<32x16xf32>
    %c0_4 = arith.constant 0 : index
    %c0_5 = arith.constant 0 : index
    %2 = vector.load %arg4[%c0_4, %c0_5] : memref<9x256xf32, #tpu.memory_space<vmem>>, vector<9x256xf32>
    %c0_6 = arith.constant 0 : index
    %c0_7 = arith.constant 0 : index
    %c0_8 = arith.constant 0 : index
    %3 = vector.load %arg1[%c0_6, %c0_7, %c0_8] : memref<1x32x256xf32, #tpu.memory_space<vmem>>, vector<1x32x256xf32>
    %4 = vector.shape_cast %3 : vector<1x32x256xf32> to vector<32x256xf32>
    %cst = arith.constant 0.000000e+00 : f32
    %5 = vector.broadcast %cst : f32 to vector<32x256xf32>
    %6 = arith.maximumf %4, %5 : vector<32x256xf32>
    %c17_i32 = arith.constant 17 : i32
    %7 = tpu.dynamic_rotate %6 by %c17_i32 dim 1 : vector<32x256xf32>, i32 -> vector<32x256xf32>
    %8 = vector.extract_strided_slice %2 {offsets = [0, 0], sizes = [1, 256], strides = [1, 1]} : vector<9x256xf32> to vector<1x256xf32>
    %9 = vector.broadcast %8 : vector<1x256xf32> to vector<32x256xf32>
    %10 = arith.mulf %7, %9 : vector<32x256xf32>
    %11 = vector.extract_strided_slice %0 {offsets = [0, 0, 0], sizes = [1, 16, 32], strides = [1, 1, 1]} : vector<9x16x32xf32> to vector<1x16x32xf32>
    %12 = vector.shape_cast %11 : vector<1x16x32xf32> to vector<16x32xf32>
    %cst_9 = arith.constant dense<0.000000e+00> : vector<16x256xf32>
    %13 = tpu.matmul %12, %10, %cst_9 {dimension_numbers = #tpu.dot_dimension_numbers<[1], [0], [0], [1], [0, 0, 1, 1], [], []>} : vector<16x32xf32>, vector<32x256xf32>, vector<16x256xf32> -> vector<16x256xf32>
    %c16_i32 = arith.constant 16 : i32
    %14 = tpu.dynamic_rotate %6 by %c16_i32 dim 1 : vector<32x256xf32>, i32 -> vector<32x256xf32>
    %15 = vector.extract_strided_slice %2 {offsets = [1, 0], sizes = [1, 256], strides = [1, 1]} : vector<9x256xf32> to vector<1x256xf32>
    %16 = vector.broadcast %15 : vector<1x256xf32> to vector<32x256xf32>
    %17 = arith.mulf %14, %16 : vector<32x256xf32>
    %18 = vector.extract_strided_slice %0 {offsets = [1, 0, 0], sizes = [1, 16, 32], strides = [1, 1, 1]} : vector<9x16x32xf32> to vector<1x16x32xf32>
    %19 = vector.shape_cast %18 : vector<1x16x32xf32> to vector<16x32xf32>
    %cst_10 = arith.constant dense<0.000000e+00> : vector<16x256xf32>
    %20 = tpu.matmul %19, %17, %cst_10 {dimension_numbers = #tpu.dot_dimension_numbers<[1], [0], [0], [1], [0, 0, 1, 1], [], []>} : vector<16x32xf32>, vector<32x256xf32>, vector<16x256xf32> -> vector<16x256xf32>
    %21 = arith.addf %13, %20 : vector<16x256xf32>
    %c15_i32 = arith.constant 15 : i32
    %22 = tpu.dynamic_rotate %6 by %c15_i32 dim 1 : vector<32x256xf32>, i32 -> vector<32x256xf32>
    %23 = vector.extract_strided_slice %2 {offsets = [2, 0], sizes = [1, 256], strides = [1, 1]} : vector<9x256xf32> to vector<1x256xf32>
    %24 = vector.broadcast %23 : vector<1x256xf32> to vector<32x256xf32>
    %25 = arith.mulf %22, %24 : vector<32x256xf32>
    %26 = vector.extract_strided_slice %0 {offsets = [2, 0, 0], sizes = [1, 16, 32], strides = [1, 1, 1]} : vector<9x16x32xf32> to vector<1x16x32xf32>
    %27 = vector.shape_cast %26 : vector<1x16x32xf32> to vector<16x32xf32>
    %cst_11 = arith.constant dense<0.000000e+00> : vector<16x256xf32>
    %28 = tpu.matmul %27, %25, %cst_11 {dimension_numbers = #tpu.dot_dimension_numbers<[1], [0], [0], [1], [0, 0, 1, 1], [], []>} : vector<16x32xf32>, vector<32x256xf32>, vector<16x256xf32> -> vector<16x256xf32>
    %29 = arith.addf %21, %28 : vector<16x256xf32>
    %c1_i32 = arith.constant 1 : i32
    %30 = tpu.dynamic_rotate %6 by %c1_i32 dim 1 : vector<32x256xf32>, i32 -> vector<32x256xf32>
    %31 = vector.extract_strided_slice %2 {offsets = [3, 0], sizes = [1, 256], strides = [1, 1]} : vector<9x256xf32> to vector<1x256xf32>
    %32 = vector.broadcast %31 : vector<1x256xf32> to vector<32x256xf32>
    %33 = arith.mulf %30, %32 : vector<32x256xf32>
    %34 = vector.extract_strided_slice %0 {offsets = [3, 0, 0], sizes = [1, 16, 32], strides = [1, 1, 1]} : vector<9x16x32xf32> to vector<1x16x32xf32>
    %35 = vector.shape_cast %34 : vector<1x16x32xf32> to vector<16x32xf32>
    %cst_12 = arith.constant dense<0.000000e+00> : vector<16x256xf32>
    %36 = tpu.matmul %35, %33, %cst_12 {dimension_numbers = #tpu.dot_dimension_numbers<[1], [0], [0], [1], [0, 0, 1, 1], [], []>} : vector<16x32xf32>, vector<32x256xf32>, vector<16x256xf32> -> vector<16x256xf32>
    %37 = arith.addf %29, %36 : vector<16x256xf32>
    %38 = vector.extract_strided_slice %0 {offsets = [4, 0, 0], sizes = [1, 16, 32], strides = [1, 1, 1]} : vector<9x16x32xf32> to vector<1x16x32xf32>
    %39 = vector.shape_cast %38 : vector<1x16x32xf32> to vector<16x32xf32>
    %cst_13 = arith.constant dense<0.000000e+00> : vector<16x256xf32>
    %40 = tpu.matmul %39, %6, %cst_13 {dimension_numbers = #tpu.dot_dimension_numbers<[1], [0], [0], [1], [0, 0, 1, 1], [], []>} : vector<16x32xf32>, vector<32x256xf32>, vector<16x256xf32> -> vector<16x256xf32>
    %41 = arith.addf %37, %40 : vector<16x256xf32>
    %c255_i32 = arith.constant 255 : i32
    %42 = tpu.dynamic_rotate %6 by %c255_i32 dim 1 : vector<32x256xf32>, i32 -> vector<32x256xf32>
    %43 = vector.extract_strided_slice %2 {offsets = [5, 0], sizes = [1, 256], strides = [1, 1]} : vector<9x256xf32> to vector<1x256xf32>
    %44 = vector.broadcast %43 : vector<1x256xf32> to vector<32x256xf32>
    %45 = arith.mulf %42, %44 : vector<32x256xf32>
    %46 = vector.extract_strided_slice %0 {offsets = [5, 0, 0], sizes = [1, 16, 32], strides = [1, 1, 1]} : vector<9x16x32xf32> to vector<1x16x32xf32>
    %47 = vector.shape_cast %46 : vector<1x16x32xf32> to vector<16x32xf32>
    %cst_14 = arith.constant dense<0.000000e+00> : vector<16x256xf32>
    %48 = tpu.matmul %47, %45, %cst_14 {dimension_numbers = #tpu.dot_dimension_numbers<[1], [0], [0], [1], [0, 0, 1, 1], [], []>} : vector<16x32xf32>, vector<32x256xf32>, vector<16x256xf32> -> vector<16x256xf32>
    %49 = arith.addf %41, %48 : vector<16x256xf32>
    %c241_i32 = arith.constant 241 : i32
    %50 = tpu.dynamic_rotate %6 by %c241_i32 dim 1 : vector<32x256xf32>, i32 -> vector<32x256xf32>
    %51 = vector.extract_strided_slice %2 {offsets = [6, 0], sizes = [1, 256], strides = [1, 1]} : vector<9x256xf32> to vector<1x256xf32>
    %52 = vector.broadcast %51 : vector<1x256xf32> to vector<32x256xf32>
    %53 = arith.mulf %50, %52 : vector<32x256xf32>
    %54 = vector.extract_strided_slice %0 {offsets = [6, 0, 0], sizes = [1, 16, 32], strides = [1, 1, 1]} : vector<9x16x32xf32> to vector<1x16x32xf32>
    %55 = vector.shape_cast %54 : vector<1x16x32xf32> to vector<16x32xf32>
    %cst_15 = arith.constant dense<0.000000e+00> : vector<16x256xf32>
    %56 = tpu.matmul %55, %53, %cst_15 {dimension_numbers = #tpu.dot_dimension_numbers<[1], [0], [0], [1], [0, 0, 1, 1], [], []>} : vector<16x32xf32>, vector<32x256xf32>, vector<16x256xf32> -> vector<16x256xf32>
    %57 = arith.addf %49, %56 : vector<16x256xf32>
    %c240_i32 = arith.constant 240 : i32
    %58 = tpu.dynamic_rotate %6 by %c240_i32 dim 1 : vector<32x256xf32>, i32 -> vector<32x256xf32>
    %59 = vector.extract_strided_slice %2 {offsets = [7, 0], sizes = [1, 256], strides = [1, 1]} : vector<9x256xf32> to vector<1x256xf32>
    %60 = vector.broadcast %59 : vector<1x256xf32> to vector<32x256xf32>
    %61 = arith.mulf %58, %60 : vector<32x256xf32>
    %62 = vector.extract_strided_slice %0 {offsets = [7, 0, 0], sizes = [1, 16, 32], strides = [1, 1, 1]} : vector<9x16x32xf32> to vector<1x16x32xf32>
    %63 = vector.shape_cast %62 : vector<1x16x32xf32> to vector<16x32xf32>
    %cst_16 = arith.constant dense<0.000000e+00> : vector<16x256xf32>
    %64 = tpu.matmul %63, %61, %cst_16 {dimension_numbers = #tpu.dot_dimension_numbers<[1], [0], [0], [1], [0, 0, 1, 1], [], []>} : vector<16x32xf32>, vector<32x256xf32>, vector<16x256xf32> -> vector<16x256xf32>
    %65 = arith.addf %57, %64 : vector<16x256xf32>
    %c239_i32 = arith.constant 239 : i32
    %66 = tpu.dynamic_rotate %6 by %c239_i32 dim 1 : vector<32x256xf32>, i32 -> vector<32x256xf32>
    %67 = vector.extract_strided_slice %2 {offsets = [8, 0], sizes = [1, 256], strides = [1, 1]} : vector<9x256xf32> to vector<1x256xf32>
    %68 = vector.broadcast %67 : vector<1x256xf32> to vector<32x256xf32>
    %69 = arith.mulf %66, %68 : vector<32x256xf32>
    %70 = vector.extract_strided_slice %0 {offsets = [8, 0, 0], sizes = [1, 16, 32], strides = [1, 1, 1]} : vector<9x16x32xf32> to vector<1x16x32xf32>
    %71 = vector.shape_cast %70 : vector<1x16x32xf32> to vector<16x32xf32>
    %cst_17 = arith.constant dense<0.000000e+00> : vector<16x256xf32>
    %72 = tpu.matmul %71, %69, %cst_17 {dimension_numbers = #tpu.dot_dimension_numbers<[1], [0], [0], [1], [0, 0, 1, 1], [], []>} : vector<16x32xf32>, vector<32x256xf32>, vector<16x256xf32> -> vector<16x256xf32>
    %73 = arith.addf %65, %72 : vector<16x256xf32>
    %cst_18 = arith.constant 0.000000e+00 : f32
    %74 = vector.broadcast %cst_18 : f32 to vector<16x256xf32>
    %75 = arith.maximumf %73, %74 : vector<16x256xf32>
    %cst_19 = arith.constant dense<0.000000e+00> : vector<32x256xf32>
    %76 = tpu.matmul %1, %75, %cst_19 {dimension_numbers = #tpu.dot_dimension_numbers<[1], [0], [0], [1], [0, 0, 1, 1], [], []>} : vector<32x16xf32>, vector<16x256xf32>, vector<32x256xf32> -> vector<32x256xf32>
    %77 = arith.addf %4, %76 : vector<32x256xf32>
    %c0_20 = arith.constant 0 : index
    %c0_21 = arith.constant 0 : index
    %c0_22 = arith.constant 0 : index
    %78 = vector.load %arg5[%c0_20, %c0_21, %c0_22] : memref<1x32x256xf32, #tpu.memory_space<vmem>>, vector<1x32x256xf32>
    %79 = vector.shape_cast %78 : vector<1x32x256xf32> to vector<32x256xf32>
    %80 = vector.shape_cast %77 : vector<32x256xf32> to vector<1x32x256xf32>
    tpu.vector_store %arg5[%c0_20, %c0_21, %c0_22], %80 {strides = array<i32>} : memref<1x32x256xf32, #tpu.memory_space<vmem>>, vector<1x32x256xf32>,
    return
  }
  func.func @transform_0(%arg0: i32) -> (i32, i32, i32) {
    %c0_i32 = arith.constant 0 : i32
    %c0_i32_0 = arith.constant 0 : i32
    %c0_i32_1 = arith.constant 0 : i32
    return %arg0, %c0_i32, %c0_i32_0 : i32, i32, i32
  }
  func.func @transform_1(%arg0: i32) -> (i32, i32, i32) {
    %c0_i32 = arith.constant 0 : i32
    %c0_i32_0 = arith.constant 0 : i32
    %c0_i32_1 = arith.constant 0 : i32
    %c0_i32_2 = arith.constant 0 : i32
    return %c0_i32, %c0_i32_0, %c0_i32_1 : i32, i32, i32
  }
  func.func @transform_2(%arg0: i32) -> (i32, i32) {
    %c0_i32 = arith.constant 0 : i32
    %c0_i32_0 = arith.constant 0 : i32
    %c0_i32_1 = arith.constant 0 : i32
    return %c0_i32, %c0_i32_0 : i32, i32
  }
  func.func @transform_3(%arg0: i32) -> (i32, i32) {
    %c0_i32 = arith.constant 0 : i32
    %c0_i32_0 = arith.constant 0 : i32
    %c0_i32_1 = arith.constant 0 : i32
    return %c0_i32, %c0_i32_0 : i32, i32
  }
  func.func @transform_4(%arg0: i32) -> (i32, i32, i32) {
    %c0_i32 = arith.constant 0 : i32
    %c0_i32_0 = arith.constant 0 : i32
    %c0_i32_1 = arith.constant 0 : i32
    return %arg0, %c0_i32, %c0_i32_0 : i32, i32, i32
  }
}

</mosaic_0001>

<llo_original>
// kernel: tpu_custom_call.1
$region0: #{tpu_custom_call.1}
  #allocation0 [shape = 'u32[]', space=smem, size = 0x4, offset = 0x4, fixed_abs, tag = 'smem constant byte address 0x4 - core index']
  #allocation1 [shape = 'u32[144,128]{1,0:T(1,128)}', space=vmem, size = 0x12000, scoped, tag = 'internal scratch']
  %s0 = inlined_call_operand.hbm [shape: f32[2,32,256], index: 0, kind: input, shape index: {}]
  %s1 = inlined_call_operand.hbm [shape: f32[9,16,32], index: 1, kind: input, shape index: {}]
  %s2 = inlined_call_operand.vmem [shape: f32[32,16], index: 2, kind: input, shape index: {}]
  %s3 = inlined_call_operand.vmem [shape: f32[9,256], index: 3, kind: input, shape index: {}]
  %s4 = inlined_call_operand.hbm [shape: f32[2,32,256], index: 4, kind: output, shape index: {}]
  %s5 = sld [smem:[#allocation0]]
  $region57: #{tpu_custom_call.1} parent=0
    _
  %s7 = ssub.s32 1, %s5
  %s8 = scalar_select 0, %s7, %s5
  $region1: #{tpu_custom_call.1} parent=0
    #allocation2 [shape = 'u8[65536]{0}', space=vmem, size = 0x10000, scoped, tag = 'input window, operand 0']
    #allocation3 [shape = 's32[2]{0}', space=sflag, size = 0x8, scoped, tag = 'scoped memory for tpu_custom_call.1']
    #allocation4 [shape = 's32[2]{0}', space=sflag, size = 0x8, scoped, tag = 'scoped memory for tpu_custom_call.1']
    #allocation5 [shape = 'u8[73728]{0}', space=vmem, size = 0x12000, scoped, tag = 'input window, operand 1, single buffered']
    #allocation6 [shape = 's32[1]{0}', space=sflag, size = 0x4, scoped, tag = 'scoped memory for tpu_custom_call.1']
    #allocation7 [shape = 'u8[65536]{0}', space=vmem, size = 0x10000, scoped, tag = 'output window, operand 0']
    %9 = vsyncpa [#allocation3], 0
    %s10 = scalar_lea.sflag [#allocation3], 1
    %11 = vsyncpa %s10, 0
    %12 = vsyncpa [#allocation6], 0
    %13 = vsyncpa [#allocation4], 0
    %s14 = scalar_lea.sflag [#allocation4], 1
    %15 = vsyncpa %s14, 0
    loop: start=0, step=1, limit=4
    $region2: #{tpu_custom_call.1} parent=1 // loop_pre_header
      _
    $region3: #{tpu_custom_call.1} parent=1 // loop_header
      %s17 = sphi 0, %s21
      %p18 = scmp.ge.s32.totalorder %s17, 4
      %s27 = sphi 0, %s29
      %s30 = sphi 0, %s27
      %s31 = sphi 0, %s30
      %s47 = sphi 0, %s31
      %s51 = sphi 0, %s51
      %s53 = sphi 0, %s51
      %s54 = sphi 0, %s53
      %s68 = sphi 0, %s54
      %s72 = sphi 0, %s72
      %s74 = sphi 0, %s72
      %s75 = sphi 0, %s74
      %s89 = sphi 0, %s75
      %s93 = sphi 0, %s93
      %s95 = sphi 0, %s93
      %s96 = sphi 0, %s95
      %s110 = sphi 0, %s96
      %s116 = sphi 0, %s118
      %s119 = sphi 0, %s116
      %s120 = sphi 0, %s119
      %s136 = sphi 0, %s120
    $region4: #{tpu_custom_call.1} parent=1 // loop_header_branch
      %20 = sbr.rel (%p18) target = $region8
    $region5: #{tpu_custom_call.1} parent=1 // loop_body
      %s22 = ssub.s32 %s17, 1
      %s23 = ssub.s32 %s17, 2
      %s24 = sadd.s32 %s17, 1
      %s25 = ssub.s32 %s17, %s24
      %p26 = scmp.eq.s32.totalorder %s25, 0
      %s28 = sadd.s32 %s27, 1
      %s29 = scalar_select %p26, %s27, %s28
      %p32 = pneg %p26
      %p33 = scmp.eq.s32.totalorder %s17, 1
      %p34 = por %p32, %p33
      %p35 = scmp.ne.s32.totalorder %s27, %s30
      %p36 = scmp.eq.s32.totalorder %s17, 0
      %p37 = por %p35, %p36
      %p38 = scmp.ne.s32.totalorder %s27, %s30
      %p39 = scmp.eq.s32.totalorder %s22, 1
      %p40 = por %p38, %p39
      %p41 = scmp.ne.s32.totalorder %s30, %s31
      %p42 = scmp.eq.s32.totalorder %s22, 0
      %p43 = por %p41, %p42
      %p44 = scmp.ne.s32.totalorder %s30, %s31
      %p45 = scmp.eq.s32.totalorder %s23, 1
      %p46 = por %p44, %p45
      %p48 = scmp.ne.s32.totalorder %s31, %s47
      %p49 = scmp.eq.s32.totalorder %s23, 0
      %p50 = por %p48, %p49
      %s52 = sadd.s32 %s51, 1
      %p55 = scmp.eq.s32.totalorder %s17, 1
      %p56 = scmp.ne.s32.totalorder %s51, %s53
      %p57 = scmp.eq.s32.totalorder %s17, 0
      %p58 = por %p56, %p57
      %p59 = scmp.ne.s32.totalorder %s51, %s53
      %p60 = scmp.eq.s32.totalorder %s22, 1
      %p61 = por %p59, %p60
      %p62 = scmp.ne.s32.totalorder %s53, %s54
      %p63 = scmp.eq.s32.totalorder %s22, 0
      %p64 = por %p62, %p63
      %p65 = scmp.ne.s32.totalorder %s53, %s54
      %p66 = scmp.eq.s32.totalorder %s23, 1
      %p67 = por %p65, %p66
      %p69 = scmp.ne.s32.totalorder %s54, %s68
      %p70 = scmp.eq.s32.totalorder %s23, 0
      %p71 = por %p69, %p70
      %s73 = sadd.s32 %s72, 1
      %p76 = scmp.eq.s32.totalorder %s17, 1
      %p77 = scmp.ne.s32.totalorder %s72, %s74
      %p78 = scmp.eq.s32.totalorder %s17, 0
      %p79 = por %p77, %p78
      %p80 = scmp.ne.s32.totalorder %s72, %s74
      %p81 = scmp.eq.s32.totalorder %s22, 1
      %p82 = por %p80, %p81
      %p83 = scmp.ne.s32.totalorder %s74, %s75
      %p84 = scmp.eq.s32.totalorder %s22, 0
      %p85 = por %p83, %p84
      %p86 = scmp.ne.s32.totalorder %s74, %s75
      %p87 = scmp.eq.s32.totalorder %s23, 1
      %p88 = por %p86, %p87
      %p90 = scmp.ne.s32.totalorder %s75, %s89
      %p91 = scmp.eq.s32.totalorder %s23, 0
      %p92 = por %p90, %p91
      %s94 = sadd.s32 %s93, 1
      %p97 = scmp.eq.s32.totalorder %s17, 1
      %p98 = scmp.ne.s32.totalorder %s93, %s95
      %p99 = scmp.eq.s32.totalorder %s17, 0
      %p100 = por %p98, %p99
      %p101 = scmp.ne.s32.totalorder %s93, %s95
      %p102 = scmp.eq.s32.totalorder %s22, 1
      %p103 = por %p101, %p102
      %p104 = scmp.ne.s32.totalorder %s95, %s96
      %p105 = scmp.eq.s32.totalorder %s22, 0
      %p106 = por %p104, %p105
      %p107 = scmp.ne.s32.totalorder %s95, %s96
      %p108 = scmp.eq.s32.totalorder %s23, 1
      %p109 = por %p107, %p108
      %p111 = scmp.ne.s32.totalorder %s96, %s110
      %p112 = scmp.eq.s32.totalorder %s23, 0
      %p113 = por %p111, %p112
      %s114 = ssub.s32 %s17, %s24
      %p115 = scmp.eq.s32.totalorder %s114, 0
      %s117 = sadd.s32 %s116, 1
      %s118 = scalar_select %p115, %s116, %s117
      %p121 = pneg %p115
      %p122 = scmp.eq.s32.totalorder %s17, 1
      %p123 = por %p121, %p122
      %p124 = scmp.ne.s32.totalorder %s116, %s119
      %p125 = scmp.eq.s32.totalorder %s17, 0
      %p126 = por %p124, %p125
      %p127 = scmp.ne.s32.totalorder %s116, %s119
      %p128 = scmp.eq.s32.totalorder %s22, 1
      %p129 = por %p127, %p128
      %p130 = scmp.ne.s32.totalorder %s119, %s120
      %p131 = scmp.eq.s32.totalorder %s22, 0
      %p132 = por %p130, %p131
      %p133 = scmp.ne.s32.totalorder %s119, %s120
      %p134 = scmp.eq.s32.totalorder %s23, 1
      %p135 = por %p133, %p134
      %p137 = scmp.ne.s32.totalorder %s120, %s136
      %p138 = scmp.eq.s32.totalorder %s23, 0
      %p139 = por %p137, %p138
      %p140 = scmp.le.s32.totalorder 1, %s17
      %p141 = scmp.lt.s32.totalorder %s17, 3
      %p142 = pnand %p140, %p141
      %p143 = pneg %p142
      // Predicated region
      $region9: #{tpu_custom_call.1} parent=5 // pred_check
        _
      $region10: #{tpu_custom_call.1} parent=5 // pred_check_branch
        %145 = sbr.rel (%p142) target = $region12
      $region11: #{tpu_custom_call.1} parent=5 // pred_region
        %s146 = ssub.s32 %s17, 1
        // Predicated region
        $region13: #{tpu_custom_call.1} parent=11 // pred_check
          %p147 = pneg %p64
        $region14: #{tpu_custom_call.1} parent=11 // pred_check_branch
          %149 = sbr.rel (%p147) target = $region16
        $region15: #{tpu_custom_call.1} parent=11 // pred_region
          %s151 = ssub.s32 2304, 2304
          %152 = vsyncadd [#allocation6], %s151
          %s153 = sshll.u32 [#allocation5], 4
          %s154 = int_to_ptr.vmem [resolvable:$true] %s153
          %159 = dma.hbm_to_vmem [thread:$0]  %s1, 2304, %s154, [#allocation6], 128, 128, 8
        $region16: #{tpu_custom_call.1} parent=11 // pred_fallthru
          _
        // Predicated region
        $region17: #{tpu_custom_call.1} parent=11 // pred_check
          %p160 = pneg %p85
        $region18: #{tpu_custom_call.1} parent=11 // pred_check_branch
          %162 = sbr.rel (%p160) target = $region20
        $region19: #{tpu_custom_call.1} parent=11 // pred_region
          _
        $region20: #{tpu_custom_call.1} parent=11 // pred_fallthru
          _
        // Predicated region
        $region21: #{tpu_custom_call.1} parent=11 // pred_check
          %p163 = pneg %p106
        $region22: #{tpu_custom_call.1} parent=11 // pred_check_branch
          %165 = sbr.rel (%p163) target = $region24
        $region23: #{tpu_custom_call.1} parent=11 // pred_region
          _
        $region24: #{tpu_custom_call.1} parent=11 // pred_fallthru
          _
      $region12: #{tpu_custom_call.1} parent=5 // pred_fallthru
        _
      %p166 = scmp.lt.s32.totalorder %s17, 2
      // Predicated region
      $region25: #{tpu_custom_call.1} parent=5 // pred_check
        %p167 = pneg %p166
      $region26: #{tpu_custom_call.1} parent=5 // pred_check_branch
        %169 = sbr.rel (%p167) target = $region28
      $region27: #{tpu_custom_call.1} parent=5 // pred_region
        // Predicated region
        $region29: #{tpu_custom_call.1} parent=27 // pred_check
          %p170 = pneg %p37
        $region30: #{tpu_custom_call.1} parent=27 // pred_check_branch
          %172 = sbr.rel (%p170) target = $region32
        $region31: #{tpu_custom_call.1} parent=27 // pred_region
          %s173 = sand.u32 %s27, 1
          %s174 = scalar_lea.sflag [#allocation3], %s173
          %s175 = sand.u32 %s27, 1
          %s176 = smul.addr %s175, 64
          %s177 = scalar_lea.vmem [#allocation2], %s176
          %s179 = ssub.s32 1024, 1024
          %180 = vsyncadd %s174, %s179
          %s181 = smul.addr %s17, 8
          %s182 = smul.addr %s181, 128
          %s183 = scalar_lea.hbm %s0, %s182
          %s184 = sshll.u32 %s177, 4
          %s185 = int_to_ptr.vmem [resolvable:$true] %s184
          %190 = dma.hbm_to_vmem [thread:$0]  %s183, 1024, %s185, %s174, 256, 256, 16
        $region32: #{tpu_custom_call.1} parent=27 // pred_fallthru
          _
      $region28: #{tpu_custom_call.1} parent=5 // pred_fallthru
        _
      %p191 = scmp.le.s32.totalorder 1, %s17
      %p192 = scmp.lt.s32.totalorder %s17, 3
      %p193 = pnand %p191, %p192
      %p194 = pneg %p193
      // Predicated region
      $region33: #{tpu_custom_call.1} parent=5 // pred_check
        _
      $region34: #{tpu_custom_call.1} parent=5 // pred_check_branch
        %196 = sbr.rel (%p193) target = $region36
      $region35: #{tpu_custom_call.1} parent=5 // pred_region
        %s197 = ssub.s32 %s17, 1
        %s198 = sand.u32 %s30, 1
        %s199 = scalar_lea.sflag [#allocation3], %s198
        %s200 = sand.u32 %s30, 1
        %s201 = smul.addr %s200, 64
        %s202 = scalar_lea.vmem [#allocation2], %s201
        // Predicated region
        $region37: #{tpu_custom_call.1} parent=35 // pred_check
          %p203 = pneg %p43
        $region38: #{tpu_custom_call.1} parent=35 // pred_check_branch
          %205 = sbr.rel (%p203) target = $region40
        $region39: #{tpu_custom_call.1} parent=35 // pred_region
          %206 = dma.done %s199, 1024
        $region40: #{tpu_custom_call.1} parent=35 // pred_fallthru
          _
        // Predicated region
        $region41: #{tpu_custom_call.1} parent=35 // pred_check
          %p207 = pneg %p64
        $region42: #{tpu_custom_call.1} parent=35 // pred_check_branch
          %209 = sbr.rel (%p207) target = $region44
        $region43: #{tpu_custom_call.1} parent=35 // pred_region
          %210 = dma.done [#allocation6], 2304
        $region44: #{tpu_custom_call.1} parent=35 // pred_fallthru
          _
        %s211 = sand.u32 %s30, 1
        %s212 = scalar_lea.sflag [#allocation3], %s211
        %s213 = sand.u32 %s30, 1
        %s214 = smul.addr %s213, 64
        %s215 = scalar_lea.vmem [#allocation2], %s214
        %p216 = pneg %p43
        %p217 = pneg %p40
        %p218 = pneg %p64
        %p219 = pneg %p61
        %p220 = pneg %p85
        %p221 = pneg %p82
        %p222 = pneg %p106
        %p223 = pneg %p103
        %p224 = pneg %p132
        %p225 = pneg %p129
        %s226 = sand.u32 %s119, 1
        %s227 = scalar_lea.sflag [#allocation4], %s226
        %s228 = sand.u32 %s119, 1
        %s229 = smul.addr %s228, 64
        %s230 = scalar_lea.vmem [#allocation7], %s229
        %v231 = vld [vmem:[#allocation5] sm:$0xff]
        %v232 = vld [vmem:[#allocation5 + $0x8] sm:$0xff]
        %v233 = vld [vmem:[#allocation5 + $0x10] sm:$0xff]
        %v234 = vld [vmem:[#allocation5 + $0x18] sm:$0xff]
        %v235 = vld [vmem:[#allocation5 + $0x20] sm:$0xff]
        %v236 = vld [vmem:[#allocation5 + $0x28] sm:$0xff]
        %v237 = vld [vmem:[#allocation5 + $0x30] sm:$0xff]
        %v238 = vld [vmem:[#allocation5 + $0x38] sm:$0xff]
        %v239 = vld [vmem:[#allocation5 + $0x40] sm:$0xff]
        %v240 = vld [vmem:[#allocation5 + $0x48] sm:$0xff]
        %v241 = vld [vmem:[#allocation5 + $0x50] sm:$0xff]
        %v242 = vld [vmem:[#allocation5 + $0x58] sm:$0xff]
        %v243 = vld [vmem:[#allocation5 + $0x60] sm:$0xff]
        %v244 = vld [vmem:[#allocation5 + $0x68] sm:$0xff]
        %v245 = vld [vmem:[#allocation5 + $0x70] sm:$0xff]
        %v246 = vld [vmem:[#allocation5 + $0x78] sm:$0xff]
        %v247 = vld [vmem:[#allocation5 + $0x80] sm:$0xff]
        %v248 = vld [vmem:[#allocation5 + $0x88] sm:$0xff]
        %v249 = vld [vmem:[%s2] sm:$0xff]
        %v250 = vld [vmem:[%s2 + $0x8] sm:$0xff]
        %v251 = vld [vmem:[%s2 + $0x10] sm:$0xff]
        %v252 = vld [vmem:[%s2 + $0x18] sm:$0xff]
        %v253 = vld [vmem:[%s3] sm:$0xff]
        %v254 = vld [vmem:[%s3 + $0x8] sm:$0xff]
        %v255 = vld [vmem:[%s3 + $0x10] sm:$0x1]
        %v256 = vld [vmem:[%s3 + $0x18] sm:$0x1]
        %v257 = vld [vmem:[%s202] sm:$0xff]
        %v258 = vld [vmem:[%s202 + $0x8] sm:$0xff]
        %v259 = vld [vmem:[%s202 + $0x10] sm:$0xff]
        %v260 = vld [vmem:[%s202 + $0x18] sm:$0xff]
        %v261 = vld [vmem:[%s202 + $0x20] sm:$0xff]
        %v262 = vld [vmem:[%s202 + $0x28] sm:$0xff]
        %v263 = vld [vmem:[%s202 + $0x30] sm:$0xff]
        %v264 = vld [vmem:[%s202 + $0x38] sm:$0xff]
        %v265 = vmax.f32 %v257, 0.0
        %v266 = vmax.f32 %v258, 0.0
        %v267 = vmax.f32 %v259, 0.0
        %v268 = vmax.f32 %v260, 0.0
        %v269 = vmax.f32 %v261, 0.0
        %v270 = vmax.f32 %v262, 0.0
        %v271 = vmax.f32 %v263, 0.0
        %v272 = vmax.f32 %v264, 0.0
        %273 = vrot.lane.b32.xlu0 %v265, 17
        %v274 = vpop.permute.xlu0 %273
        %275 = vrot.lane.b32.xlu0 %v267, 17
        %v276 = vpop.permute.xlu0 %275
        %277 = vrot.lane.b32.xlu0 %v269, 17
        %v278 = vpop.permute.xlu0 %277
        %279 = vrot.lane.b32.xlu0 %v271, 17
        %v280 = vpop.permute.xlu0 %279
        %281 = vrot.lane.b32.xlu0 %v266, 17
        %v282 = vpop.permute.xlu0 %281
        %283 = vrot.lane.b32.xlu0 %v268, 17
        %v284 = vpop.permute.xlu0 %283
        %285 = vrot.lane.b32.xlu0 %v270, 17
        %v286 = vpop.permute.xlu0 %285
        %287 = vrot.lane.b32.xlu0 %v272, 17
        %v288 = vpop.permute.xlu0 %287
        %v289 = vlaneseq
        %v290 = vand.u32 %v289, 127
        %vm291 = vcmp.lt.s32.totalorder %v290, 17
        %v292 = vsel %vm291, %v274, %v282
        %v293 = vsel %vm291, %v276, %v284
        %v294 = vsel %vm291, %v278, %v286
        %v295 = vsel %vm291, %v280, %v288
        %v296 = vsel %vm291, %v282, %v274
        %v297 = vsel %vm291, %v284, %v276
        %v298 = vsel %vm291, %v286, %v278
        %v299 = vsel %vm291, %v288, %v280
        %v300 = vlaneseq
        %v301 = vshrl.u32 %v300, 7
        %v302 = vsub.s32 0, %v301
        %v303 = vrot.slane %v253, %v302
        %v304 = vlaneseq
        %v305 = vshrl.u32 %v304, 7
        %v306 = vsub.s32 0, %v305
        %v307 = vrot.slane %v254, %v306
        %v308 = vmul.f32 %v296, %v303
        %v309 = vmul.f32 %v292, %v307
        %v310 = vmul.f32 %v297, %v303
        %v311 = vmul.f32 %v293, %v307
        %v312 = vmul.f32 %v298, %v303
        %v313 = vmul.f32 %v294, %v307
        %v314 = vmul.f32 %v299, %v303
        %v315 = vmul.f32 %v295, %v307
        %316 = vrot.lane.b32.xlu0 %v265, 16
        %v317 = vpop.permute.xlu0 %316
        %318 = vrot.lane.b32.xlu0 %v267, 16
        %v319 = vpop.permute.xlu0 %318
        %320 = vrot.lane.b32.xlu0 %v269, 16
        %v321 = vpop.permute.xlu0 %320
        %322 = vrot.lane.b32.xlu0 %v271, 16
        %v323 = vpop.permute.xlu0 %322
        %324 = vrot.lane.b32.xlu0 %v266, 16
        %v325 = vpop.permute.xlu0 %324
        %326 = vrot.lane.b32.xlu0 %v268, 16
        %v327 = vpop.permute.xlu0 %326
        %328 = vrot.lane.b32.xlu0 %v270, 16
        %v329 = vpop.permute.xlu0 %328
        %330 = vrot.lane.b32.xlu0 %v272, 16
        %v331 = vpop.permute.xlu0 %330
        %vm332 = vcmp.lt.s32.totalorder %v290, 16
        %v333 = vsel %vm332, %v317, %v325
        %v334 = vsel %vm332, %v319, %v327
        %v335 = vsel %vm332, %v321, %v329
        %v336 = vsel %vm332, %v323, %v331
        %v337 = vsel %vm332, %v325, %v317
        %v338 = vsel %vm332, %v327, %v319
        %v339 = vsel %vm332, %v329, %v321
        %v340 = vsel %vm332, %v331, %v323
        %v341 = vlaneseq
        %v342 = vshrl.u32 %v341, 7
        %v343 = vsub.s32 1, %v342
        %v344 = vrot.slane %v253, %v343
        %v345 = vlaneseq
        %v346 = vshrl.u32 %v345, 7
        %v347 = vsub.s32 1, %v346
        %v348 = vrot.slane %v254, %v347
        %v349 = vmul.f32 %v337, %v344
        %v350 = vmul.f32 %v333, %v348
        %v351 = vmul.f32 %v338, %v344
        %v352 = vmul.f32 %v334, %v348
        %v353 = vmul.f32 %v339, %v344
        %v354 = vmul.f32 %v335, %v348
        %v355 = vmul.f32 %v340, %v344
        %v356 = vmul.f32 %v336, %v348
        %vm357 = vcmask 261120
        %v359 = vsel %vm357, %v233, 0
        %v362 = vsel %vm357, %v234, 0
        %364 = vmatprep.subr.mxu0 %v350
        %365 = vmatpush1.msra.mxu0 %v349
        %366 = vmatprep.subr.mxu0 %v352
        %367 = vmatpush1.msra.mxu0 %v351
        %368 = vmatprep.subr.mxu0 %v354
        %369 = vmatpush1.msra.mxu0 %v353
        %370 = vmatprep.subr.mxu0 %v356
        %371 = vmatpush1.msra.mxu0 %v355
        %372 = vmatprep.subr.mxu0 0.0
        %373 = vmatpush1.msra.mxu0 0.0
        %374 = vmatprep.subr.mxu0 0.0
        %375 = vmatpush1.msra.mxu0 0.0
        %376 = vmatprep.subr.mxu0 0.0
        %377 = vmatpush1.msra.mxu0 0.0
        %378 = vmatprep.subr.mxu0 0.0
        %379 = vmatpush1.msra.mxu0 0.0
        %380 = vmatprep.subr.mxu0 0.0
        %381 = vmatpush1.msra.mxu0 0.0
        %382 = vmatprep.subr.mxu0 0.0
        %383 = vmatpush1.msra.mxu0 0.0
        %384 = vmatprep.subr.mxu0 0.0
        %385 = vmatpush1.msra.mxu0 0.0
        %386 = vmatprep.subr.mxu0 0.0
        %387 = vmatpush1.msra.mxu0 0.0
        %388 = vmatprep.subr.mxu0 0.0
        %389 = vmatpush1.msra.mxu0 0.0
        %390 = vmatprep.subr.mxu0 0.0
        %391 = vmatpush1.msra.mxu0 0.0
        %392 = vmatprep.subr.mxu0 0.0
        %393 = vmatpush1.msra.mxu0 0.0
        %394 = vmatprep.subr.mxu0 0.0
        %395 = vmatpush1.msra.mxu0 0.0
        %396 = vmatprep.subr.mxu0 0.0
        %397 = vmatpush1.msra.mxu0 0.0
        %398 = vmatprep.subr.mxu0 0.0
        %399 = vmatpush1.msra.mxu0 0.0
        %400 = vmatprep.subr.mxu0 0.0
        %401 = vmatpush1.msra.mxu0 0.0
        %402 = vmatprep.subr.mxu0 0.0
        %403 = vmatpush1.msra.mxu0 0.0
        %404 = vmatprep.subr.mxu0 0.0
        %405 = vmatpush1.msra.mxu0 0.0
        %406 = vmatprep.subr.mxu0 0.0
        %407 = vmatpush1.msra.mxu0 0.0
        %408 = vmatprep.subr.mxu0 0.0
        %409 = vmatpush1.msra.mxu0 0.0
        %410 = vmatprep.subr.mxu0 0.0
        %411 = vmatpush1.msra.mxu0 0.0
        %412 = vmatprep.subr.mxu0 0.0
        %413 = vmatpush1.msra.mxu0 0.0
        %414 = vmatprep.subr.mxu0 0.0
        %415 = vmatpush1.msra.mxu0 0.0
        %416 = vmatprep.subr.mxu0 0.0
        %417 = vmatpush1.msra.mxu0 0.0
        %418 = vmatprep.subr.mxu0 0.0
        %419 = vmatpush1.msra.mxu0 0.0
        %420 = vmatprep.subr.mxu0 0.0
        %421 = vmatpush1.msra.mxu0 0.0
        %422 = vmatprep.subr.mxu0 0.0
        %423 = vmatpush1.msra.mxu0 0.0
        %424 = vmatprep.subr.mxu0 0.0
        %425 = vmatpush1.msra.mxu0 0.0
        %426 = vmatprep.subr.mxu0 0.0
        %427 = vmatpush1.msra.mxu0 0.0
        %428 = vmatprep.mubr.f32.mxu0 0.0
        %429 = vmatmul.mubr.f32.gmra.mrb[0].mxu0 %v359
        %v430 = vpop.f32.mrb[0].mxu0
        %v431 = vadd.f32 0.0, %v430
        %v432 = vpop.f32.mrb[0].mxu0
        %v433 = vadd.f32 0.0, %v432
        %434 = vmatprep.mubr.f32.mxu0 0.0
        %435 = vmatmul.mubr.f32.gmra.mrb[0].mxu0 %v362
        %v436 = vpop.f32.mrb[0].mxu0
        %v437 = vadd.f32 0.0, %v436
        %v438 = vpop.f32.mrb[0].mxu0
        %v439 = vadd.f32 0.0, %v438
        %440 = vdwg.mxu0
        %v442 = vsel %vm357, %v231, 0
        %v445 = vsel %vm357, %v232, 0
        %447 = vmatprep.subr.mxu0 %v309
        %448 = vmatpush1.msra.mxu0 %v308
        %449 = vmatprep.subr.mxu0 %v311
        %450 = vmatpush1.msra.mxu0 %v310
        %451 = vmatprep.subr.mxu0 %v313
        %452 = vmatpush1.msra.mxu0 %v312
        %453 = vmatprep.subr.mxu0 %v315
        %454 = vmatpush1.msra.mxu0 %v314
        %455 = vmatprep.subr.mxu0 0.0
        %456 = vmatpush1.msra.mxu0 0.0
        %457 = vmatprep.subr.mxu0 0.0
        %458 = vmatpush1.msra.mxu0 0.0
        %459 = vmatprep.subr.mxu0 0.0
        %460 = vmatpush1.msra.mxu0 0.0
        %461 = vmatprep.subr.mxu0 0.0
        %462 = vmatpush1.msra.mxu0 0.0
        %463 = vmatprep.subr.mxu0 0.0
        %464 = vmatpush1.msra.mxu0 0.0
        %465 = vmatprep.subr.mxu0 0.0
        %466 = vmatpush1.msra.mxu0 0.0
        %467 = vmatprep.subr.mxu0 0.0
        %468 = vmatpush1.msra.mxu0 0.0
        %469 = vmatprep.subr.mxu0 0.0
        %470 = vmatpush1.msra.mxu0 0.0
        %471 = vmatprep.subr.mxu0 0.0
        %472 = vmatpush1.msra.mxu0 0.0
        %473 = vmatprep.subr.mxu0 0.0
        %474 = vmatpush1.msra.mxu0 0.0
        %475 = vmatprep.subr.mxu0 0.0
        %476 = vmatpush1.msra.mxu0 0.0
        %477 = vmatprep.subr.mxu0 0.0
        %478 = vmatpush1.msra.mxu0 0.0
        %479 = vmatprep.subr.mxu0 0.0
        %480 = vmatpush1.msra.mxu0 0.0
        %481 = vmatprep.subr.mxu0 0.0
        %482 = vmatpush1.msra.mxu0 0.0
        %483 = vmatprep.subr.mxu0 0.0
        %484 = vmatpush1.msra.mxu0 0.0
        %485 = vmatprep.subr.mxu0 0.0
        %486 = vmatpush1.msra.mxu0 0.0
        %487 = vmatprep.subr.mxu0 0.0
        %488 = vmatpush1.msra.mxu0 0.0
        %489 = vmatprep.subr.mxu0 0.0
        %490 = vmatpush1.msra.mxu0 0.0
        %491 = vmatprep.subr.mxu0 0.0
        %492 = vmatpush1.msra.mxu0 0.0
        %493 = vmatprep.subr.mxu0 0.0
        %494 = vmatpush1.msra.mxu0 0.0
        %495 = vmatprep.subr.mxu0 0.0
        %496 = vmatpush1.msra.mxu0 0.0
        %497 = vmatprep.subr.mxu0 0.0
        %498 = vmatpush1.msra.mxu0 0.0
        %499 = vmatprep.subr.mxu0 0.0
        %500 = vmatpush1.msra.mxu0 0.0
        %501 = vmatprep.subr.mxu0 0.0
        %502 = vmatpush1.msra.mxu0 0.0
        %503 = vmatprep.subr.mxu0 0.0
        %504 = vmatpush1.msra.mxu0 0.0
        %505 = vmatprep.subr.mxu0 0.0
        %506 = vmatpush1.msra.mxu0 0.0
        %507 = vmatprep.subr.mxu0 0.0
        %508 = vmatpush1.msra.mxu0 0.0
        %509 = vmatprep.subr.mxu0 0.0
        %510 = vmatpush1.msra.mxu0 0.0
        %511 = vmatprep.mubr.f32.mxu0 0.0
        %512 = vmatmul.mubr.f32.gmra.mrb[0].mxu0 %v442
        %v513 = vpop.f32.mrb[0].mxu0
        %v514 = vadd.f32 %v431, %v513
        %v515 = vpop.f32.mrb[0].mxu0
        %v516 = vadd.f32 %v433, %v515
        %517 = vmatprep.mubr.f32.mxu0 0.0
        %518 = vmatmul.mubr.f32.gmra.mrb[0].mxu0 %v445
        %v519 = vpop.f32.mrb[0].mxu0
        %v520 = vadd.f32 %v437, %v519
        %v521 = vpop.f32.mrb[0].mxu0
        %v522 = vadd.f32 %v439, %v521
        %523 = vdwg.mxu0
        %524 = vrot.lane.b32.xlu0 %v265, 15
        %v525 = vpop.permute.xlu0 %524
        %526 = vrot.lane.b32.xlu0 %v267, 15
        %v527 = vpop.permute.xlu0 %526
        %528 = vrot.lane.b32.xlu0 %v269, 15
        %v529 = vpop.permute.xlu0 %528
        %530 = vrot.lane.b32.xlu0 %v271, 15
        %v531 = vpop.permute.xlu0 %530
        %532 = vrot.lane.b32.xlu0 %v266, 15
        %v533 = vpop.permute.xlu0 %532
        %534 = vrot.lane.b32.xlu0 %v268, 15
        %v535 = vpop.permute.xlu0 %534
        %536 = vrot.lane.b32.xlu0 %v270, 15
        %v537 = vpop.permute.xlu0 %536
        %538 = vrot.lane.b32.xlu0 %v272, 15
        %v539 = vpop.permute.xlu0 %538
        %vm540 = vcmp.lt.s32.totalorder %v290, 15
        %v541 = vsel %vm540, %v525, %v533
        %v542 = vsel %vm540, %v527, %v535
        %v543 = vsel %vm540, %v529, %v537
        %v544 = vsel %vm540, %v531, %v539
        %v545 = vsel %vm540, %v533, %v525
        %v546 = vsel %vm540, %v535, %v527
        %v547 = vsel %vm540, %v537, %v529
        %v548 = vsel %vm540, %v539, %v531
        %v549 = vlaneseq
        %v550 = vshrl.u32 %v549, 7
        %v551 = vsub.s32 2, %v550
        %v552 = vrot.slane %v253, %v551
        %v553 = vlaneseq
        %v554 = vshrl.u32 %v553, 7
        %v555 = vsub.s32 2, %v554
        %v556 = vrot.slane %v254, %v555
        %v557 = vmul.f32 %v545, %v552
        %v558 = vmul.f32 %v541, %v556
        %v559 = vmul.f32 %v546, %v552
        %v560 = vmul.f32 %v542, %v556
        %v561 = vmul.f32 %v547, %v552
        %v562 = vmul.f32 %v543, %v556
        %v563 = vmul.f32 %v548, %v552
        %v564 = vmul.f32 %v544, %v556
        %v566 = vsel %vm357, %v235, 0
        %v569 = vsel %vm357, %v236, 0
        %571 = vmatprep.subr.mxu0 %v558
        %572 = vmatpush1.msra.mxu0 %v557
        %573 = vmatprep.subr.mxu0 %v560
        %574 = vmatpush1.msra.mxu0 %v559
        %575 = vmatprep.subr.mxu0 %v562
        %576 = vmatpush1.msra.mxu0 %v561
        %577 = vmatprep.subr.mxu0 %v564
        %578 = vmatpush1.msra.mxu0 %v563
        %579 = vmatprep.subr.mxu0 0.0
        %580 = vmatpush1.msra.mxu0 0.0
        %581 = vmatprep.subr.mxu0 0.0
        %582 = vmatpush1.msra.mxu0 0.0
        %583 = vmatprep.subr.mxu0 0.0
        %584 = vmatpush1.msra.mxu0 0.0
        %585 = vmatprep.subr.mxu0 0.0
        %586 = vmatpush1.msra.mxu0 0.0
        %587 = vmatprep.subr.mxu0 0.0
        %588 = vmatpush1.msra.mxu0 0.0
        %589 = vmatprep.subr.mxu0 0.0
        %590 = vmatpush1.msra.mxu0 0.0
        %591 = vmatprep.subr.mxu0 0.0
        %592 = vmatpush1.msra.mxu0 0.0
        %593 = vmatprep.subr.mxu0 0.0
        %594 = vmatpush1.msra.mxu0 0.0
        %595 = vmatprep.subr.mxu0 0.0
        %596 = vmatpush1.msra.mxu0 0.0
        %597 = vmatprep.subr.mxu0 0.0
        %598 = vmatpush1.msra.mxu0 0.0
        %599 = vmatprep.subr.mxu0 0.0
        %600 = vmatpush1.msra.mxu0 0.0
        %601 = vmatprep.subr.mxu0 0.0
        %602 = vmatpush1.msra.mxu0 0.0
        %603 = vmatprep.subr.mxu0 0.0
        %604 = vmatpush1.msra.mxu0 0.0
        %605 = vmatprep.subr.mxu0 0.0
        %606 = vmatpush1.msra.mxu0 0.0
        %607 = vmatprep.subr.mxu0 0.0
        %608 = vmatpush1.msra.mxu0 0.0
        %609 = vmatprep.subr.mxu0 0.0
        %610 = vmatpush1.msra.mxu0 0.0
        %611 = vmatprep.subr.mxu0 0.0
        %612 = vmatpush1.msra.mxu0 0.0
        %613 = vmatprep.subr.mxu0 0.0
        %614 = vmatpush1.msra.mxu0 0.0
        %615 = vmatprep.subr.mxu0 0.0
        %616 = vmatpush1.msra.mxu0 0.0
        %617 = vmatprep.subr.mxu0 0.0
        %618 = vmatpush1.msra.mxu0 0.0
        %619 = vmatprep.subr.mxu0 0.0
        %620 = vmatpush1.msra.mxu0 0.0
        %621 = vmatprep.subr.mxu0 0.0
        %622 = vmatpush1.msra.mxu0 0.0
        %623 = vmatprep.subr.mxu0 0.0
        %624 = vmatpush1.msra.mxu0 0.0
        %625 = vmatprep.subr.mxu0 0.0
        %626 = vmatpush1.msra.mxu0 0.0
        %627 = vmatprep.subr.mxu0 0.0
        %628 = vmatpush1.msra.mxu0 0.0
        %629 = vmatprep.subr.mxu0 0.0
        %630 = vmatpush1.msra.mxu0 0.0
        %631 = vmatprep.subr.mxu0 0.0
        %632 = vmatpush1.msra.mxu0 0.0
        %633 = vmatprep.subr.mxu0 0.0
        %634 = vmatpush1.msra.mxu0 0.0
        %635 = vmatprep.mubr.f32.mxu0 0.0
        %636 = vmatmul.mubr.f32.gmra.mrb[0].mxu0 %v566
        %v637 = vpop.f32.mrb[0].mxu0
        %v638 = vadd.f32 0.0, %v637
        %v639 = vpop.f32.mrb[0].mxu0
        %v640 = vadd.f32 0.0, %v639
        %641 = vmatprep.mubr.f32.mxu0 0.0
        %642 = vmatmul.mubr.f32.gmra.mrb[0].mxu0 %v569
        %v643 = vpop.f32.mrb[0].mxu0
        %v644 = vadd.f32 0.0, %v643
        %v645 = vpop.f32.mrb[0].mxu0
        %v646 = vadd.f32 0.0, %v645
        %647 = vdwg.mxu0
        %v648 = vadd.f32 %v514, %v638
        %v649 = vadd.f32 %v516, %v640
        %v650 = vadd.f32 %v520, %v644
        %v651 = vadd.f32 %v522, %v646
        %652 = vrot.lane.b32.xlu0 %v265, 1
        %v653 = vpop.permute.xlu0 %652
        %654 = vrot.lane.b32.xlu0 %v267, 1
        %v655 = vpop.permute.xlu0 %654
        %656 = vrot.lane.b32.xlu0 %v269, 1
        %v657 = vpop.permute.xlu0 %656
        %658 = vrot.lane.b32.xlu0 %v271, 1
        %v659 = vpop.permute.xlu0 %658
        %660 = vrot.lane.b32.xlu0 %v266, 1
        %v661 = vpop.permute.xlu0 %660
        %662 = vrot.lane.b32.xlu0 %v268, 1
        %v663 = vpop.permute.xlu0 %662
        %664 = vrot.lane.b32.xlu0 %v270, 1
        %v665 = vpop.permute.xlu0 %664
        %666 = vrot.lane.b32.xlu0 %v272, 1
        %v667 = vpop.permute.xlu0 %666
        %vm668 = vcmp.lt.s32.totalorder %v290, 1
        %v669 = vsel %vm668, %v653, %v661
        %v670 = vsel %vm668, %v655, %v663
        %v671 = vsel %vm668, %v657, %v665
        %v672 = vsel %vm668, %v659, %v667
        %v673 = vsel %vm668, %v661, %v653
        %v674 = vsel %vm668, %v663, %v655
        %v675 = vsel %vm668, %v665, %v657
        %v676 = vsel %vm668, %v667, %v659
        %v677 = vlaneseq
        %v678 = vshrl.u32 %v677, 7
        %v679 = vsub.s32 3, %v678
        %v680 = vrot.slane %v253, %v679
        %v681 = vlaneseq
        %v682 = vshrl.u32 %v681, 7
        %v683 = vsub.s32 3, %v682
        %v684 = vrot.slane %v254, %v683
        %v685 = vmul.f32 %v673, %v680
        %v686 = vmul.f32 %v669, %v684
        %v687 = vmul.f32 %v674, %v680
        %v688 = vmul.f32 %v670, %v684
        %v689 = vmul.f32 %v675, %v680
        %v690 = vmul.f32 %v671, %v684
        %v691 = vmul.f32 %v676, %v680
        %v692 = vmul.f32 %v672, %v684
        %v694 = vsel %vm357, %v237, 0
        %v697 = vsel %vm357, %v238, 0
        %699 = vmatprep.subr.mxu0 %v686
        %700 = vmatpush1.msra.mxu0 %v685
        %701 = vmatprep.subr.mxu0 %v688
        %702 = vmatpush1.msra.mxu0 %v687
        %703 = vmatprep.subr.mxu0 %v690
        %704 = vmatpush1.msra.mxu0 %v689
        %705 = vmatprep.subr.mxu0 %v692
        %706 = vmatpush1.msra.mxu0 %v691
        %707 = vmatprep.subr.mxu0 0.0
        %708 = vmatpush1.msra.mxu0 0.0
        %709 = vmatprep.subr.mxu0 0.0
        %710 = vmatpush1.msra.mxu0 0.0
        %711 = vmatprep.subr.mxu0 0.0
        %712 = vmatpush1.msra.mxu0 0.0
        %713 = vmatprep.subr.mxu0 0.0
        %714 = vmatpush1.msra.mxu0 0.0
        %715 = vmatprep.subr.mxu0 0.0
        %716 = vmatpush1.msra.mxu0 0.0
        %717 = vmatprep.subr.mxu0 0.0
        %718 = vmatpush1.msra.mxu0 0.0
        %719 = vmatprep.subr.mxu0 0.0
        %720 = vmatpush1.msra.mxu0 0.0
        %721 = vmatprep.subr.mxu0 0.0
        %722 = vmatpush1.msra.mxu0 0.0
        %723 = vmatprep.subr.mxu0 0.0
        %724 = vmatpush1.msra.mxu0 0.0
        %725 = vmatprep.subr.mxu0 0.0
        %726 = vmatpush1.msra.mxu0 0.0
        %727 = vmatprep.subr.mxu0 0.0
        %728 = vmatpush1.msra.mxu0 0.0
        %729 = vmatprep.subr.mxu0 0.0
        %730 = vmatpush1.msra.mxu0 0.0
        %731 = vmatprep.subr.mxu0 0.0
        %732 = vmatpush1.msra.mxu0 0.0
        %733 = vmatprep.subr.mxu0 0.0
        %734 = vmatpush1.msra.mxu0 0.0
        %735 = vmatprep.subr.mxu0 0.0
        %736 = vmatpush1.msra.mxu0 0.0
        %737 = vmatprep.subr.mxu0 0.0
        %738 = vmatpush1.msra.mxu0 0.0
        %739 = vmatprep.subr.mxu0 0.0
        %740 = vmatpush1.msra.mxu0 0.0
        %741 = vmatprep.subr.mxu0 0.0
        %742 = vmatpush1.msra.mxu0 0.0
        %743 = vmatprep.subr.mxu0 0.0
        %744 = vmatpush1.msra.mxu0 0.0
        %745 = vmatprep.subr.mxu0 0.0
        %746 = vmatpush1.msra.mxu0 0.0
        %747 = vmatprep.subr.mxu0 0.0
        %748 = vmatpush1.msra.mxu0 0.0
        %749 = vmatprep.subr.mxu0 0.0
        %750 = vmatpush1.msra.mxu0 0.0
        %751 = vmatprep.subr.mxu0 0.0
        %752 = vmatpush1.msra.mxu0 0.0
        %753 = vmatprep.subr.mxu0 0.0
        %754 = vmatpush1.msra.mxu0 0.0
        %755 = vmatprep.subr.mxu0 0.0
        %756 = vmatpush1.msra.mxu0 0.0
        %757 = vmatprep.subr.mxu0 0.0
        %758 = vmatpush1.msra.mxu0 0.0
        %759 = vmatprep.subr.mxu0 0.0
        %760 = vmatpush1.msra.mxu0 0.0
        %761 = vmatprep.subr.mxu0 0.0
        %762 = vmatpush1.msra.mxu0 0.0
        %763 = vmatprep.mubr.f32.mxu0 0.0
        %764 = vmatmul.mubr.f32.gmra.mrb[0].mxu0 %v694
        %v765 = vpop.f32.mrb[0].mxu0
        %v766 = vadd.f32 0.0, %v765
        %v767 = vpop.f32.mrb[0].mxu0
        %v768 = vadd.f32 0.0, %v767
        %769 = vmatprep.mubr.f32.mxu0 0.0
        %770 = vmatmul.mubr.f32.gmra.mrb[0].mxu0 %v697
        %v771 = vpop.f32.mrb[0].mxu0
        %v772 = vadd.f32 0.0, %v771
        %v773 = vpop.f32.mrb[0].mxu0
        %v774 = vadd.f32 0.0, %v773
        %775 = vdwg.mxu0
        %v776 = vadd.f32 %v648, %v766
        %v777 = vadd.f32 %v649, %v768
        %v778 = vadd.f32 %v650, %v772
        %v779 = vadd.f32 %v651, %v774
        %v781 = vsel %vm357, %v239, 0
        %v784 = vsel %vm357, %v240, 0
        %786 = vmatprep.subr.mxu0 %v266
        %787 = vmatpush1.msra.mxu0 %v265
        %788 = vmatprep.subr.mxu0 %v268
        %789 = vmatpush1.msra.mxu0 %v267
        %790 = vmatprep.subr.mxu0 %v270
        %791 = vmatpush1.msra.mxu0 %v269
        %792 = vmatprep.subr.mxu0 %v272
        %793 = vmatpush1.msra.mxu0 %v271
        %794 = vmatprep.subr.mxu0 0.0
        %795 = vmatpush1.msra.mxu0 0.0
        %796 = vmatprep.subr.mxu0 0.0
        %797 = vmatpush1.msra.mxu0 0.0
        %798 = vmatprep.subr.mxu0 0.0
        %799 = vmatpush1.msra.mxu0 0.0
        %800 = vmatprep.subr.mxu0 0.0
        %801 = vmatpush1.msra.mxu0 0.0
        %802 = vmatprep.subr.mxu0 0.0
        %803 = vmatpush1.msra.mxu0 0.0
        %804 = vmatprep.subr.mxu0 0.0
        %805 = vmatpush1.msra.mxu0 0.0
        %806 = vmatprep.subr.mxu0 0.0
        %807 = vmatpush1.msra.mxu0 0.0
        %808 = vmatprep.subr.mxu0 0.0
        %809 = vmatpush1.msra.mxu0 0.0
        %810 = vmatprep.subr.mxu0 0.0
        %811 = vmatpush1.msra.mxu0 0.0
        %812 = vmatprep.subr.mxu0 0.0
        %813 = vmatpush1.msra.mxu0 0.0
        %814 = vmatprep.subr.mxu0 0.0
        %815 = vmatpush1.msra.mxu0 0.0
        %816 = vmatprep.subr.mxu0 0.0
        %817 = vmatpush1.msra.mxu0 0.0
        %818 = vmatprep.subr.mxu0 0.0
        %819 = vmatpush1.msra.mxu0 0.0
        %820 = vmatprep.subr.mxu0 0.0
        %821 = vmatpush1.msra.mxu0 0.0
        %822 = vmatprep.subr.mxu0 0.0
        %823 = vmatpush1.msra.mxu0 0.0
        %824 = vmatprep.subr.mxu0 0.0
        %825 = vmatpush1.msra.mxu0 0.0
        %826 = vmatprep.subr.mxu0 0.0
        %827 = vmatpush1.msra.mxu0 0.0
        %828 = vmatprep.subr.mxu0 0.0
        %829 = vmatpush1.msra.mxu0 0.0
        %830 = vmatprep.subr.mxu0 0.0
        %831 = vmatpush1.msra.mxu0 0.0
        %832 = vmatprep.subr.mxu0 0.0
        %833 = vmatpush1.msra.mxu0 0.0
        %834 = vmatprep.subr.mxu0 0.0
        %835 = vmatpush1.msra.mxu0 0.0
        %836 = vmatprep.subr.mxu0 0.0
        %837 = vmatpush1.msra.mxu0 0.0
        %838 = vmatprep.subr.mxu0 0.0
        %839 = vmatpush1.msra.mxu0 0.0
        %840 = vmatprep.subr.mxu0 0.0
        %841 = vmatpush1.msra.mxu0 0.0
        %842 = vmatprep.subr.mxu0 0.0
        %843 = vmatpush1.msra.mxu0 0.0
        %844 = vmatprep.subr.mxu0 0.0
        %845 = vmatpush1.msra.mxu0 0.0
        %846 = vmatprep.subr.mxu0 0.0
        %847 = vmatpush1.msra.mxu0 0.0
        %848 = vmatprep.subr.mxu0 0.0
        %849 = vmatpush1.msra.mxu0 0.0
        %850 = vmatprep.mubr.f32.mxu0 0.0
        %851 = vmatmul.mubr.f32.gmra.mrb[0].mxu0 %v781
        %v852 = vpop.f32.mrb[0].mxu0
        %v853 = vadd.f32 0.0, %v852
        %v854 = vpop.f32.mrb[0].mxu0
        %v855 = vadd.f32 0.0, %v854
        %856 = vmatprep.mubr.f32.mxu0 0.0
        %857 = vmatmul.mubr.f32.gmra.mrb[0].mxu0 %v784
        %v858 = vpop.f32.mrb[0].mxu0
        %v859 = vadd.f32 0.0, %v858
        %v860 = vpop.f32.mrb[0].mxu0
        %v861 = vadd.f32 0.0, %v860
        %862 = vdwg.mxu0
        %v863 = vadd.f32 %v776, %v853
        %v864 = vadd.f32 %v777, %v855
        %v865 = vadd.f32 %v778, %v859
        %v866 = vadd.f32 %v779, %v861
        %867 = vrot.lane.b32.xlu0 %v265, 127
        %v868 = vpop.permute.xlu0 %867
        %869 = vrot.lane.b32.xlu0 %v267, 127
        %v870 = vpop.permute.xlu0 %869
        %871 = vrot.lane.b32.xlu0 %v269, 127
        %v872 = vpop.permute.xlu0 %871
        %873 = vrot.lane.b32.xlu0 %v271, 127
        %v874 = vpop.permute.xlu0 %873
        %875 = vrot.lane.b32.xlu0 %v266, 127
        %v876 = vpop.permute.xlu0 %875
        %877 = vrot.lane.b32.xlu0 %v268, 127
        %v878 = vpop.permute.xlu0 %877
        %879 = vrot.lane.b32.xlu0 %v270, 127
        %v880 = vpop.permute.xlu0 %879
        %881 = vrot.lane.b32.xlu0 %v272, 127
        %v882 = vpop.permute.xlu0 %881
        %vm883 = vcmp.lt.s32.totalorder %v290, 127
        %v884 = vsel %vm883, %v868, %v876
        %v885 = vsel %vm883, %v870, %v878
        %v886 = vsel %vm883, %v872, %v880
        %v887 = vsel %vm883, %v874, %v882
        %v888 = vsel %vm883, %v876, %v868
        %v889 = vsel %vm883, %v878, %v870
        %v890 = vsel %vm883, %v880, %v872
        %v891 = vsel %vm883, %v882, %v874
        %v892 = vlaneseq
        %v893 = vshrl.u32 %v892, 7
        %v894 = vsub.s32 5, %v893
        %v895 = vrot.slane %v253, %v894
        %v896 = vlaneseq
        %v897 = vshrl.u32 %v896, 7
        %v898 = vsub.s32 5, %v897
        %v899 = vrot.slane %v254, %v898
        %v900 = vmul.f32 %v884, %v895
        %v901 = vmul.f32 %v888, %v899
        %v902 = vmul.f32 %v885, %v895
        %v903 = vmul.f32 %v889, %v899
        %v904 = vmul.f32 %v886, %v895
        %v905 = vmul.f32 %v890, %v899
        %v906 = vmul.f32 %v887, %v895
        %v907 = vmul.f32 %v891, %v899
        %v909 = vsel %vm357, %v241, 0
        %v912 = vsel %vm357, %v242, 0
        %914 = vmatprep.subr.mxu0 %v901
        %915 = vmatpush1.msra.mxu0 %v900
        %916 = vmatprep.subr.mxu0 %v903
        %917 = vmatpush1.msra.mxu0 %v902
        %918 = vmatprep.subr.mxu0 %v905
        %919 = vmatpush1.msra.mxu0 %v904
        %920 = vmatprep.subr.mxu0 %v907
        %921 = vmatpush1.msra.mxu0 %v906
        %922 = vmatprep.subr.mxu0 0.0
        %923 = vmatpush1.msra.mxu0 0.0
        %924 = vmatprep.subr.mxu0 0.0
        %925 = vmatpush1.msra.mxu0 0.0
        %926 = vmatprep.subr.mxu0 0.0
        %927 = vmatpush1.msra.mxu0 0.0
        %928 = vmatprep.subr.mxu0 0.0
        %929 = vmatpush1.msra.mxu0 0.0
        %930 = vmatprep.subr.mxu0 0.0
        %931 = vmatpush1.msra.mxu0 0.0
        %932 = vmatprep.subr.mxu0 0.0
        %933 = vmatpush1.msra.mxu0 0.0
        %934 = vmatprep.subr.mxu0 0.0
        %935 = vmatpush1.msra.mxu0 0.0
        %936 = vmatprep.subr.mxu0 0.0
        %937 = vmatpush1.msra.mxu0 0.0
        %938 = vmatprep.subr.mxu0 0.0
        %939 = vmatpush1.msra.mxu0 0.0
        %940 = vmatprep.subr.mxu0 0.0
        %941 = vmatpush1.msra.mxu0 0.0
        %942 = vmatprep.subr.mxu0 0.0
        %943 = vmatpush1.msra.mxu0 0.0
        %944 = vmatprep.subr.mxu0 0.0
        %945 = vmatpush1.msra.mxu0 0.0
        %946 = vmatprep.subr.mxu0 0.0
        %947 = vmatpush1.msra.mxu0 0.0
        %948 = vmatprep.subr.mxu0 0.0
        %949 = vmatpush1.msra.mxu0 0.0
        %950 = vmatprep.subr.mxu0 0.0
        %951 = vmatpush1.msra.mxu0 0.0
        %952 = vmatprep.subr.mxu0 0.0
        %953 = vmatpush1.msra.mxu0 0.0
        %954 = vmatprep.subr.mxu0 0.0
        %955 = vmatpush1.msra.mxu0 0.0
        %956 = vmatprep.subr.mxu0 0.0
        %957 = vmatpush1.msra.mxu0 0.0
        %958 = vmatprep.subr.mxu0 0.0
        %959 = vmatpush1.msra.mxu0 0.0
        %960 = vmatprep.subr.mxu0 0.0
        %961 = vmatpush1.msra.mxu0 0.0
        %962 = vmatprep.subr.mxu0 0.0
        %963 = vmatpush1.msra.mxu0 0.0
        %964 = vmatprep.subr.mxu0 0.0
        %965 = vmatpush1.msra.mxu0 0.0
        %966 = vmatprep.subr.mxu0 0.0
        %967 = vmatpush1.msra.mxu0 0.0
        %968 = vmatprep.subr.mxu0 0.0
        %969 = vmatpush1.msra.mxu0 0.0
        %970 = vmatprep.subr.mxu0 0.0
        %971 = vmatpush1.msra.mxu0 0.0
        %972 = vmatprep.subr.mxu0 0.0
        %973 = vmatpush1.msra.mxu0 0.0
        %974 = vmatprep.subr.mxu0 0.0
        %975 = vmatpush1.msra.mxu0 0.0
        %976 = vmatprep.subr.mxu0 0.0
        %977 = vmatpush1.msra.mxu0 0.0
        %978 = vmatprep.mubr.f32.mxu0 0.0
        %979 = vmatmul.mubr.f32.gmra.mrb[0].mxu0 %v909
        %v980 = vpop.f32.mrb[0].mxu0
        %v981 = vadd.f32 0.0, %v980
        %v982 = vpop.f32.mrb[0].mxu0
        %v983 = vadd.f32 0.0, %v982
        %984 = vmatprep.mubr.f32.mxu0 0.0
        %985 = vmatmul.mubr.f32.gmra.mrb[0].mxu0 %v912
        %v986 = vpop.f32.mrb[0].mxu0
        %v987 = vadd.f32 0.0, %v986
        %v988 = vpop.f32.mrb[0].mxu0
        %v989 = vadd.f32 0.0, %v988
        %990 = vdwg.mxu0
        %v991 = vadd.f32 %v863, %v981
        %v992 = vadd.f32 %v864, %v983
        %v993 = vadd.f32 %v865, %v987
        %v994 = vadd.f32 %v866, %v989
        %995 = vrot.lane.b32.xlu0 %v265, 113
        %v996 = vpop.permute.xlu0 %995
        %997 = vrot.lane.b32.xlu0 %v267, 113
        %v998 = vpop.permute.xlu0 %997
        %999 = vrot.lane.b32.xlu0 %v269, 113
        %v1000 = vpop.permute.xlu0 %999
        %1001 = vrot.lane.b32.xlu0 %v271, 113
        %v1002 = vpop.permute.xlu0 %1001
        %1003 = vrot.lane.b32.xlu0 %v266, 113
        %v1004 = vpop.permute.xlu0 %1003
        %1005 = vrot.lane.b32.xlu0 %v268, 113
        %v1006 = vpop.permute.xlu0 %1005
        %1007 = vrot.lane.b32.xlu0 %v270, 113
        %v1008 = vpop.permute.xlu0 %1007
        %1009 = vrot.lane.b32.xlu0 %v272, 113
        %v1010 = vpop.permute.xlu0 %1009
        %vm1011 = vcmp.lt.s32.totalorder %v290, 113
        %v1012 = vsel %vm1011, %v996, %v1004
        %v1013 = vsel %vm1011, %v998, %v1006
        %v1014 = vsel %vm1011, %v1000, %v1008
        %v1015 = vsel %vm1011, %v1002, %v1010
        %v1016 = vsel %vm1011, %v1004, %v996
        %v1017 = vsel %vm1011, %v1006, %v998
        %v1018 = vsel %vm1011, %v1008, %v1000
        %v1019 = vsel %vm1011, %v1010, %v1002
        %v1020 = vlaneseq
        %v1021 = vshrl.u32 %v1020, 7
        %v1022 = vsub.s32 6, %v1021
        %v1023 = vrot.slane %v253, %v1022
        %v1024 = vlaneseq
        %v1025 = vshrl.u32 %v1024, 7
        %v1026 = vsub.s32 6, %v1025
        %v1027 = vrot.slane %v254, %v1026
        %v1028 = vmul.f32 %v1012, %v1023
        %v1029 = vmul.f32 %v1016, %v1027
        %v1030 = vmul.f32 %v1013, %v1023
        %v1031 = vmul.f32 %v1017, %v1027
        %v1032 = vmul.f32 %v1014, %v1023
        %v1033 = vmul.f32 %v1018, %v1027
        %v1034 = vmul.f32 %v1015, %v1023
        %v1035 = vmul.f32 %v1019, %v1027
        %v1037 = vsel %vm357, %v243, 0
        %v1040 = vsel %vm357, %v244, 0
        %1042 = vmatprep.subr.mxu0 %v1029
        %1043 = vmatpush1.msra.mxu0 %v1028
        %1044 = vmatprep.subr.mxu0 %v1031
        %1045 = vmatpush1.msra.mxu0 %v1030
        %1046 = vmatprep.subr.mxu0 %v1033
        %1047 = vmatpush1.msra.mxu0 %v1032
        %1048 = vmatprep.subr.mxu0 %v1035
        %1049 = vmatpush1.msra.mxu0 %v1034
        %1050 = vmatprep.subr.mxu0 0.0
        %1051 = vmatpush1.msra.mxu0 0.0
        %1052 = vmatprep.subr.mxu0 0.0
        %1053 = vmatpush1.msra.mxu0 0.0
        %1054 = vmatprep.subr.mxu0 0.0
        %1055 = vmatpush1.msra.mxu0 0.0
        %1056 = vmatprep.subr.mxu0 0.0
        %1057 = vmatpush1.msra.mxu0 0.0
        %1058 = vmatprep.subr.mxu0 0.0
        %1059 = vmatpush1.msra.mxu0 0.0
        %1060 = vmatprep.subr.mxu0 0.0
        %1061 = vmatpush1.msra.mxu0 0.0
        %1062 = vmatprep.subr.mxu0 0.0
        %1063 = vmatpush1.msra.mxu0 0.0
        %1064 = vmatprep.subr.mxu0 0.0
        %1065 = vmatpush1.msra.mxu0 0.0
        %1066 = vmatprep.subr.mxu0 0.0
        %1067 = vmatpush1.msra.mxu0 0.0
        %1068 = vmatprep.subr.mxu0 0.0
        %1069 = vmatpush1.msra.mxu0 0.0
        %1070 = vmatprep.subr.mxu0 0.0
        %1071 = vmatpush1.msra.mxu0 0.0
        %1072 = vmatprep.subr.mxu0 0.0
        %1073 = vmatpush1.msra.mxu0 0.0
        %1074 = vmatprep.subr.mxu0 0.0
        %1075 = vmatpush1.msra.mxu0 0.0
        %1076 = vmatprep.subr.mxu0 0.0
        %1077 = vmatpush1.msra.mxu0 0.0
        %1078 = vmatprep.subr.mxu0 0.0
        %1079 = vmatpush1.msra.mxu0 0.0
        %1080 = vmatprep.subr.mxu0 0.0
        %1081 = vmatpush1.msra.mxu0 0.0
        %1082 = vmatprep.subr.mxu0 0.0
        %1083 = vmatpush1.msra.mxu0 0.0
        %1084 = vmatprep.subr.mxu0 0.0
        %1085 = vmatpush1.msra.mxu0 0.0
        %1086 = vmatprep.subr.mxu0 0.0
        %1087 = vmatpush1.msra.mxu0 0.0
        %1088 = vmatprep.subr.mxu0 0.0
        %1089 = vmatpush1.msra.mxu0 0.0
        %1090 = vmatprep.subr.mxu0 0.0
        %1091 = vmatpush1.msra.mxu0 0.0
        %1092 = vmatprep.subr.mxu0 0.0
        %1093 = vmatpush1.msra.mxu0 0.0
        %1094 = vmatprep.subr.mxu0 0.0
        %1095 = vmatpush1.msra.mxu0 0.0
        %1096 = vmatprep.subr.mxu0 0.0
        %1097 = vmatpush1.msra.mxu0 0.0
        %1098 = vmatprep.subr.mxu0 0.0
        %1099 = vmatpush1.msra.mxu0 0.0
        %1100 = vmatprep.subr.mxu0 0.0
        %1101 = vmatpush1.msra.mxu0 0.0
        %1102 = vmatprep.subr.mxu0 0.0
        %1103 = vmatpush1.msra.mxu0 0.0
        %1104 = vmatprep.subr.mxu0 0.0
        %1105 = vmatpush1.msra.mxu0 0.0
        %1106 = vmatprep.mubr.f32.mxu0 0.0
        %1107 = vmatmul.mubr.f32.gmra.mrb[0].mxu0 %v1037
        %v1108 = vpop.f32.mrb[0].mxu0
        %v1109 = vadd.f32 0.0, %v1108
        %v1110 = vpop.f32.mrb[0].mxu0
        %v1111 = vadd.f32 0.0, %v1110
        %1112 = vmatprep.mubr.f32.mxu0 0.0
        %1113 = vmatmul.mubr.f32.gmra.mrb[0].mxu0 %v1040
        %v1114 = vpop.f32.mrb[0].mxu0
        %v1115 = vadd.f32 0.0, %v1114
        %v1116 = vpop.f32.mrb[0].mxu0
        %v1117 = vadd.f32 0.0, %v1116
        %1118 = vdwg.mxu0
        %v1119 = vadd.f32 %v991, %v1109
        %v1120 = vadd.f32 %v992, %v1111
        %v1121 = vadd.f32 %v993, %v1115
        %v1122 = vadd.f32 %v994, %v1117
        %1123 = vrot.lane.b32.xlu0 %v265, 112
        %v1124 = vpop.permute.xlu0 %1123
        %1125 = vrot.lane.b32.xlu0 %v267, 112
        %v1126 = vpop.permute.xlu0 %1125
        %1127 = vrot.lane.b32.xlu0 %v269, 112
        %v1128 = vpop.permute.xlu0 %1127
        %1129 = vrot.lane.b32.xlu0 %v271, 112
        %v1130 = vpop.permute.xlu0 %1129
        %1131 = vrot.lane.b32.xlu0 %v266, 112
        %v1132 = vpop.permute.xlu0 %1131
        %1133 = vrot.lane.b32.xlu0 %v268, 112
        %v1134 = vpop.permute.xlu0 %1133
        %1135 = vrot.lane.b32.xlu0 %v270, 112
        %v1136 = vpop.permute.xlu0 %1135
        %1137 = vrot.lane.b32.xlu0 %v272, 112
        %v1138 = vpop.permute.xlu0 %1137
        %vm1139 = vcmp.lt.s32.totalorder %v290, 112
        %v1140 = vsel %vm1139, %v1124, %v1132
        %v1141 = vsel %vm1139, %v1126, %v1134
        %v1142 = vsel %vm1139, %v1128, %v1136
        %v1143 = vsel %vm1139, %v1130, %v1138
        %v1144 = vsel %vm1139, %v1132, %v1124
        %v1145 = vsel %vm1139, %v1134, %v1126
        %v1146 = vsel %vm1139, %v1136, %v1128
        %v1147 = vsel %vm1139, %v1138, %v1130
        %v1148 = vlaneseq
        %v1149 = vshrl.u32 %v1148, 7
        %v1150 = vsub.s32 7, %v1149
        %v1151 = vrot.slane %v253, %v1150
        %v1152 = vlaneseq
        %v1153 = vshrl.u32 %v1152, 7
        %v1154 = vsub.s32 7, %v1153
        %v1155 = vrot.slane %v254, %v1154
        %v1156 = vmul.f32 %v1140, %v1151
        %v1157 = vmul.f32 %v1144, %v1155
        %v1158 = vmul.f32 %v1141, %v1151
        %v1159 = vmul.f32 %v1145, %v1155
        %v1160 = vmul.f32 %v1142, %v1151
        %v1161 = vmul.f32 %v1146, %v1155
        %v1162 = vmul.f32 %v1143, %v1151
        %v1163 = vmul.f32 %v1147, %v1155
        %v1165 = vsel %vm357, %v245, 0
        %v1168 = vsel %vm357, %v246, 0
        %1170 = vmatprep.subr.mxu0 %v1157
        %1171 = vmatpush1.msra.mxu0 %v1156
        %1172 = vmatprep.subr.mxu0 %v1159
        %1173 = vmatpush1.msra.mxu0 %v1158
        %1174 = vmatprep.subr.mxu0 %v1161
        %1175 = vmatpush1.msra.mxu0 %v1160
        %1176 = vmatprep.subr.mxu0 %v1163
        %1177 = vmatpush1.msra.mxu0 %v1162
        %1178 = vmatprep.subr.mxu0 0.0
        %1179 = vmatpush1.msra.mxu0 0.0
        %1180 = vmatprep.subr.mxu0 0.0
        %1181 = vmatpush1.msra.mxu0 0.0
        %1182 = vmatprep.subr.mxu0 0.0
        %1183 = vmatpush1.msra.mxu0 0.0
        %1184 = vmatprep.subr.mxu0 0.0
        %1185 = vmatpush1.msra.mxu0 0.0
        %1186 = vmatprep.subr.mxu0 0.0
        %1187 = vmatpush1.msra.mxu0 0.0
        %1188 = vmatprep.subr.mxu0 0.0
        %1189 = vmatpush1.msra.mxu0 0.0
        %1190 = vmatprep.subr.mxu0 0.0
        %1191 = vmatpush1.msra.mxu0 0.0
        %1192 = vmatprep.subr.mxu0 0.0
        %1193 = vmatpush1.msra.mxu0 0.0
        %1194 = vmatprep.subr.mxu0 0.0
        %1195 = vmatpush1.msra.mxu0 0.0
        %1196 = vmatprep.subr.mxu0 0.0
        %1197 = vmatpush1.msra.mxu0 0.0
        %1198 = vmatprep.subr.mxu0 0.0
        %1199 = vmatpush1.msra.mxu0 0.0
        %1200 = vmatprep.subr.mxu0 0.0
        %1201 = vmatpush1.msra.mxu0 0.0
        %1202 = vmatprep.subr.mxu0 0.0
        %1203 = vmatpush1.msra.mxu0 0.0
        %1204 = vmatprep.subr.mxu0 0.0
        %1205 = vmatpush1.msra.mxu0 0.0
        %1206 = vmatprep.subr.mxu0 0.0
        %1207 = vmatpush1.msra.mxu0 0.0
        %1208 = vmatprep.subr.mxu0 0.0
        %1209 = vmatpush1.msra.mxu0 0.0
        %1210 = vmatprep.subr.mxu0 0.0
        %1211 = vmatpush1.msra.mxu0 0.0
        %1212 = vmatprep.subr.mxu0 0.0
        %1213 = vmatpush1.msra.mxu0 0.0
        %1214 = vmatprep.subr.mxu0 0.0
        %1215 = vmatpush1.msra.mxu0 0.0
        %1216 = vmatprep.subr.mxu0 0.0
        %1217 = vmatpush1.msra.mxu0 0.0
        %1218 = vmatprep.subr.mxu0 0.0
        %1219 = vmatpush1.msra.mxu0 0.0
        %1220 = vmatprep.subr.mxu0 0.0
        %1221 = vmatpush1.msra.mxu0 0.0
        %1222 = vmatprep.subr.mxu0 0.0
        %1223 = vmatpush1.msra.mxu0 0.0
        %1224 = vmatprep.subr.mxu0 0.0
        %1225 = vmatpush1.msra.mxu0 0.0
        %1226 = vmatprep.subr.mxu0 0.0
        %1227 = vmatpush1.msra.mxu0 0.0
        %1228 = vmatprep.subr.mxu0 0.0
        %1229 = vmatpush1.msra.mxu0 0.0
        %1230 = vmatprep.subr.mxu0 0.0
        %1231 = vmatpush1.msra.mxu0 0.0
        %1232 = vmatprep.subr.mxu0 0.0
        %1233 = vmatpush1.msra.mxu0 0.0
        %1234 = vmatprep.mubr.f32.mxu0 0.0
        %1235 = vmatmul.mubr.f32.gmra.mrb[0].mxu0 %v1165
        %v1236 = vpop.f32.mrb[0].mxu0
        %v1237 = vadd.f32 0.0, %v1236
        %v1238 = vpop.f32.mrb[0].mxu0
        %v1239 = vadd.f32 0.0, %v1238
        %1240 = vmatprep.mubr.f32.mxu0 0.0
        %1241 = vmatmul.mubr.f32.gmra.mrb[0].mxu0 %v1168
        %v1242 = vpop.f32.mrb[0].mxu0
        %v1243 = vadd.f32 0.0, %v1242
        %v1244 = vpop.f32.mrb[0].mxu0
        %v1245 = vadd.f32 0.0, %v1244
        %1246 = vdwg.mxu0
        %v1247 = vadd.f32 %v1119, %v1237
        %v1248 = vadd.f32 %v1120, %v1239
        %v1249 = vadd.f32 %v1121, %v1243
        %v1250 = vadd.f32 %v1122, %v1245
        %1251 = vrot.lane.b32.xlu0 %v265, 111
        %v1252 = vpop.permute.xlu0 %1251
        %1253 = vrot.lane.b32.xlu0 %v267, 111
        %v1254 = vpop.permute.xlu0 %1253
        %1255 = vrot.lane.b32.xlu0 %v269, 111
        %v1256 = vpop.permute.xlu0 %1255
        %1257 = vrot.lane.b32.xlu0 %v271, 111
        %v1258 = vpop.permute.xlu0 %1257
        %1259 = vrot.lane.b32.xlu0 %v266, 111
        %v1260 = vpop.permute.xlu0 %1259
        %1261 = vrot.lane.b32.xlu0 %v268, 111
        %v1262 = vpop.permute.xlu0 %1261
        %1263 = vrot.lane.b32.xlu0 %v270, 111
        %v1264 = vpop.permute.xlu0 %1263
        %1265 = vrot.lane.b32.xlu0 %v272, 111
        %v1266 = vpop.permute.xlu0 %1265
        %vm1267 = vcmp.lt.s32.totalorder %v290, 111
        %v1268 = vsel %vm1267, %v1252, %v1260
        %v1269 = vsel %vm1267, %v1254, %v1262
        %v1270 = vsel %vm1267, %v1256, %v1264
        %v1271 = vsel %vm1267, %v1258, %v1266
        %v1272 = vsel %vm1267, %v1260, %v1252
        %v1273 = vsel %vm1267, %v1262, %v1254
        %v1274 = vsel %vm1267, %v1264, %v1256
        %v1275 = vsel %vm1267, %v1266, %v1258
        %v1276 = vlaneseq
        %v1277 = vshrl.u32 %v1276, 7
        %v1278 = vsub.s32 0, %v1277
        %v1279 = vrot.slane %v255, %v1278
        %v1280 = vlaneseq
        %v1281 = vshrl.u32 %v1280, 7
        %v1282 = vsub.s32 0, %v1281
        %v1283 = vrot.slane %v256, %v1282
        %v1284 = vmul.f32 %v1268, %v1279
        %v1285 = vmul.f32 %v1272, %v1283
        %v1286 = vmul.f32 %v1269, %v1279
        %v1287 = vmul.f32 %v1273, %v1283
        %v1288 = vmul.f32 %v1270, %v1279
        %v1289 = vmul.f32 %v1274, %v1283
        %v1290 = vmul.f32 %v1271, %v1279
        %v1291 = vmul.f32 %v1275, %v1283
        %v1293 = vsel %vm357, %v247, 0
        %v1296 = vsel %vm357, %v248, 0
        %1298 = vmatprep.subr.mxu0 %v1285
        %1299 = vmatpush1.msra.mxu0 %v1284
        %1300 = vmatprep.subr.mxu0 %v1287
        %1301 = vmatpush1.msra.mxu0 %v1286
        %1302 = vmatprep.subr.mxu0 %v1289
        %1303 = vmatpush1.msra.mxu0 %v1288
        %1304 = vmatprep.subr.mxu0 %v1291
        %1305 = vmatpush1.msra.mxu0 %v1290
        %1306 = vmatprep.subr.mxu0 0.0
        %1307 = vmatpush1.msra.mxu0 0.0
        %1308 = vmatprep.subr.mxu0 0.0
        %1309 = vmatpush1.msra.mxu0 0.0
        %1310 = vmatprep.subr.mxu0 0.0
        %1311 = vmatpush1.msra.mxu0 0.0
        %1312 = vmatprep.subr.mxu0 0.0
        %1313 = vmatpush1.msra.mxu0 0.0
        %1314 = vmatprep.subr.mxu0 0.0
        %1315 = vmatpush1.msra.mxu0 0.0
        %1316 = vmatprep.subr.mxu0 0.0
        %1317 = vmatpush1.msra.mxu0 0.0
        %1318 = vmatprep.subr.mxu0 0.0
        %1319 = vmatpush1.msra.mxu0 0.0
        %1320 = vmatprep.subr.mxu0 0.0
        %1321 = vmatpush1.msra.mxu0 0.0
        %1322 = vmatprep.subr.mxu0 0.0
        %1323 = vmatpush1.msra.mxu0 0.0
        %1324 = vmatprep.subr.mxu0 0.0
        %1325 = vmatpush1.msra.mxu0 0.0
        %1326 = vmatprep.subr.mxu0 0.0
        %1327 = vmatpush1.msra.mxu0 0.0
        %1328 = vmatprep.subr.mxu0 0.0
        %1329 = vmatpush1.msra.mxu0 0.0
        %1330 = vmatprep.subr.mxu0 0.0
        %1331 = vmatpush1.msra.mxu0 0.0
        %1332 = vmatprep.subr.mxu0 0.0
        %1333 = vmatpush1.msra.mxu0 0.0
        %1334 = vmatprep.subr.mxu0 0.0
        %1335 = vmatpush1.msra.mxu0 0.0
        %1336 = vmatprep.subr.mxu0 0.0
        %1337 = vmatpush1.msra.mxu0 0.0
        %1338 = vmatprep.subr.mxu0 0.0
        %1339 = vmatpush1.msra.mxu0 0.0
        %1340 = vmatprep.subr.mxu0 0.0
        %1341 = vmatpush1.msra.mxu0 0.0
        %1342 = vmatprep.subr.mxu0 0.0
        %1343 = vmatpush1.msra.mxu0 0.0
        %1344 = vmatprep.subr.mxu0 0.0
        %1345 = vmatpush1.msra.mxu0 0.0
        %1346 = vmatprep.subr.mxu0 0.0
        %1347 = vmatpush1.msra.mxu0 0.0
        %1348 = vmatprep.subr.mxu0 0.0
        %1349 = vmatpush1.msra.mxu0 0.0
        %1350 = vmatprep.subr.mxu0 0.0
        %1351 = vmatpush1.msra.mxu0 0.0
        %1352 = vmatprep.subr.mxu0 0.0
        %1353 = vmatpush1.msra.mxu0 0.0
        %1354 = vmatprep.subr.mxu0 0.0
        %1355 = vmatpush1.msra.mxu0 0.0
        %1356 = vmatprep.subr.mxu0 0.0
        %1357 = vmatpush1.msra.mxu0 0.0
        %1358 = vmatprep.subr.mxu0 0.0
        %1359 = vmatpush1.msra.mxu0 0.0
        %1360 = vmatprep.subr.mxu0 0.0
        %1361 = vmatpush1.msra.mxu0 0.0
        %1362 = vmatprep.mubr.f32.mxu0 0.0
        %1363 = vmatmul.mubr.f32.gmra.mrb[0].mxu0 %v1293
        %v1364 = vpop.f32.mrb[0].mxu0
        %v1365 = vadd.f32 0.0, %v1364
        %v1366 = vpop.f32.mrb[0].mxu0
        %v1367 = vadd.f32 0.0, %v1366
        %1368 = vmatprep.mubr.f32.mxu0 0.0
        %1369 = vmatmul.mubr.f32.gmra.mrb[0].mxu0 %v1296
        %v1370 = vpop.f32.mrb[0].mxu0
        %v1371 = vadd.f32 0.0, %v1370
        %v1372 = vpop.f32.mrb[0].mxu0
        %v1373 = vadd.f32 0.0, %v1372
        %1374 = vdwg.mxu0
        %v1375 = vadd.f32 %v1247, %v1365
        %v1376 = vadd.f32 %v1248, %v1367
        %v1377 = vadd.f32 %v1249, %v1371
        %v1378 = vadd.f32 %v1250, %v1373
        %v1379 = vmax.f32 %v1375, 0.0
        %v1380 = vmax.f32 %v1376, 0.0
        %v1381 = vmax.f32 %v1377, 0.0
        %v1382 = vmax.f32 %v1378, 0.0
        %vm1383 = vcmask 130048
        %v1385 = vsel %vm1383, %v249, 0
        %v1388 = vsel %vm1383, %v250, 0
        %v1391 = vsel %vm1383, %v251, 0
        %v1394 = vsel %vm1383, %v252, 0
        %1396 = vmatprep.subr.mxu0 %v1380
        %1397 = vmatpush1.msra.mxu0 %v1379
        %1398 = vmatprep.subr.mxu0 %v1382
        %1399 = vmatpush1.msra.mxu0 %v1381
        %1400 = vmatprep.subr.mxu0 0.0
        %1401 = vmatpush1.msra.mxu0 0.0
        %1402 = vmatprep.subr.mxu0 0.0
        %1403 = vmatpush1.msra.mxu0 0.0
        %1404 = vmatprep.subr.mxu0 0.0
        %1405 = vmatpush1.msra.mxu0 0.0
        %1406 = vmatprep.subr.mxu0 0.0
        %1407 = vmatpush1.msra.mxu0 0.0
        %1408 = vmatprep.subr.mxu0 0.0
        %1409 = vmatpush1.msra.mxu0 0.0
        %1410 = vmatprep.subr.mxu0 0.0
        %1411 = vmatpush1.msra.mxu0 0.0
        %1412 = vmatprep.subr.mxu0 0.0
        %1413 = vmatpush1.msra.mxu0 0.0
        %1414 = vmatprep.subr.mxu0 0.0
        %1415 = vmatpush1.msra.mxu0 0.0
        %1416 = vmatprep.subr.mxu0 0.0
        %1417 = vmatpush1.msra.mxu0 0.0
        %1418 = vmatprep.subr.mxu0 0.0
        %1419 = vmatpush1.msra.mxu0 0.0
        %1420 = vmatprep.subr.mxu0 0.0
        %1421 = vmatpush1.msra.mxu0 0.0
        %1422 = vmatprep.subr.mxu0 0.0
        %1423 = vmatpush1.msra.mxu0 0.0
        %1424 = vmatprep.subr.mxu0 0.0
        %1425 = vmatpush1.msra.mxu0 0.0
        %1426 = vmatprep.subr.mxu0 0.0
        %1427 = vmatpush1.msra.mxu0 0.0
        %1428 = vmatprep.subr.mxu0 0.0
        %1429 = vmatpush1.msra.mxu0 0.0
        %1430 = vmatprep.subr.mxu0 0.0
        %1431 = vmatpush1.msra.mxu0 0.0
        %1432 = vmatprep.subr.mxu0 0.0
        %1433 = vmatpush1.msra.mxu0 0.0
        %1434 = vmatprep.subr.mxu0 0.0
        %1435 = vmatpush1.msra.mxu0 0.0
        %1436 = vmatprep.subr.mxu0 0.0
        %1437 = vmatpush1.msra.mxu0 0.0
        %1438 = vmatprep.subr.mxu0 0.0
        %1439 = vmatpush1.msra.mxu0 0.0
        %1440 = vmatprep.subr.mxu0 0.0
        %1441 = vmatpush1.msra.mxu0 0.0
        %1442 = vmatprep.subr.mxu0 0.0
        %1443 = vmatpush1.msra.mxu0 0.0
        %1444 = vmatprep.subr.mxu0 0.0
        %1445 = vmatpush1.msra.mxu0 0.0
        %1446 = vmatprep.subr.mxu0 0.0
        %1447 = vmatpush1.msra.mxu0 0.0
        %1448 = vmatprep.subr.mxu0 0.0
        %1449 = vmatpush1.msra.mxu0 0.0
        %1450 = vmatprep.subr.mxu0 0.0
        %1451 = vmatpush1.msra.mxu0 0.0
        %1452 = vmatprep.subr.mxu0 0.0
        %1453 = vmatpush1.msra.mxu0 0.0
        %1454 = vmatprep.subr.mxu0 0.0
        %1455 = vmatpush1.msra.mxu0 0.0
        %1456 = vmatprep.subr.mxu0 0.0
        %1457 = vmatpush1.msra.mxu0 0.0
        %1458 = vmatprep.subr.mxu0 0.0
        %1459 = vmatpush1.msra.mxu0 0.0
        %1460 = vmatprep.mubr.f32.mxu0 0.0
        %1461 = vmatmul.mubr.f32.gmra.mrb[0].mxu0 %v1385
        %v1462 = vpop.f32.mrb[0].mxu0
        %v1463 = vadd.f32 0.0, %v1462
        %v1464 = vpop.f32.mrb[0].mxu0
        %v1465 = vadd.f32 0.0, %v1464
        %1466 = vmatprep.mubr.f32.mxu0 0.0
        %1467 = vmatmul.mubr.f32.gmra.mrb[0].mxu0 %v1388
        %v1468 = vpop.f32.mrb[0].mxu0
        %v1469 = vadd.f32 0.0, %v1468
        %v1470 = vpop.f32.mrb[0].mxu0
        %v1471 = vadd.f32 0.0, %v1470
        %1472 = vmatprep.mubr.f32.mxu0 0.0
        %1473 = vmatmul.mubr.f32.gmra.mrb[0].mxu0 %v1391
        %v1474 = vpop.f32.mrb[0].mxu0
        %v1475 = vadd.f32 0.0, %v1474
        %v1476 = vpop.f32.mrb[0].mxu0
        %v1477 = vadd.f32 0.0, %v1476
        %1478 = vmatprep.mubr.f32.mxu0 0.0
        %1479 = vmatmul.mubr.f32.gmra.mrb[0].mxu0 %v1394
        %v1480 = vpop.f32.mrb[0].mxu0
        %v1481 = vadd.f32 0.0, %v1480
        %v1482 = vpop.f32.mrb[0].mxu0
        %v1483 = vadd.f32 0.0, %v1482
        %1484 = vdwg.mxu0
        %v1485 = vadd.f32 %v257, %v1463
        %v1486 = vadd.f32 %v258, %v1465
        %v1487 = vadd.f32 %v259, %v1469
        %v1488 = vadd.f32 %v260, %v1471
        %v1489 = vadd.f32 %v261, %v1475
        %v1490 = vadd.f32 %v262, %v1477
        %v1491 = vadd.f32 %v263, %v1481
        %v1492 = vadd.f32 %v264, %v1483
        %1493 = vst [vmem:[%s230] sm:$0xff] %v1485
        %1494 = vst [vmem:[%s230 + $0x8] sm:$0xff] %v1486
        %1495 = vst [vmem:[%s230 + $0x10] sm:$0xff] %v1487
        %1496 = vst [vmem:[%s230 + $0x18] sm:$0xff] %v1488
        %1497 = vst [vmem:[%s230 + $0x20] sm:$0xff] %v1489
        %1498 = vst [vmem:[%s230 + $0x28] sm:$0xff] %v1490
        %1499 = vst [vmem:[%s230 + $0x30] sm:$0xff] %v1491
        %1500 = vst [vmem:[%s230 + $0x38] sm:$0xff] %v1492
        %s1501 = sand.u32 %s119, 1
        %s1502 = scalar_lea.sflag [#allocation4], %s1501
        %s1503 = sand.u32 %s119, 1
        %s1504 = smul.addr %s1503, 64
        %s1505 = scalar_lea.vmem [#allocation7], %s1504
        // Predicated region
        $region45: #{tpu_custom_call.1} parent=35 // pred_check
          %p1506 = pneg %p129
        $region46: #{tpu_custom_call.1} parent=35 // pred_check_branch
          %1508 = sbr.rel (%p1506) target = $region48
        $region47: #{tpu_custom_call.1} parent=35 // pred_region
          %s1510 = ssub.s32 1024, 1024
          %1511 = vsyncadd %s1502, %s1510
          %s1512 = smul.addr %s22, 8
          %s1513 = smul.addr %s1512, 128
          %s1514 = scalar_lea.hbm %s4, %s1513
          %s1515 = sshll.u32 %s1505, 4
          %s1516 = int_to_ptr.vmem [resolvable:$true] %s1515
          %1521 = dma.vmem_to_hbm [thread:$0]  %s1516, 1024, %s1514, %s1502, 256, 256, 16
        $region48: #{tpu_custom_call.1} parent=35 // pred_fallthru
          _
      $region36: #{tpu_custom_call.1} parent=5 // pred_fallthru
        _
      %p1522 = scmp.le.s32.totalorder 2, %s17
      // Predicated region
      $region49: #{tpu_custom_call.1} parent=5 // pred_check
        %p1523 = pneg %p1522
      $region50: #{tpu_custom_call.1} parent=5 // pred_check_branch
        %1525 = sbr.rel (%p1523) target = $region52
      $region51: #{tpu_custom_call.1} parent=5 // pred_region
        %s1526 = ssub.s32 %s17, 2
        // Predicated region
        $region53: #{tpu_custom_call.1} parent=51 // pred_check
          %p1527 = pneg %p135
        $region54: #{tpu_custom_call.1} parent=51 // pred_check_branch
          %1529 = sbr.rel (%p1527) target = $region56
        $region55: #{tpu_custom_call.1} parent=51 // pred_region
          %s1530 = sand.u32 %s120, 1
          %s1531 = scalar_lea.sflag [#allocation4], %s1530
          %s1532 = sand.u32 %s120, 1
          %s1533 = smul.addr %s1532, 64
          %s1534 = scalar_lea.vmem [#allocation7], %s1533
          %1535 = dma.done %s1531, 1024
        $region56: #{tpu_custom_call.1} parent=51 // pred_fallthru
          _
      $region52: #{tpu_custom_call.1} parent=5 // pred_fallthru
        _
    $region6: #{tpu_custom_call.1} parent=1 // loop_footer
      %s21 = sadd.s32 1, %s17
    $region7: #{tpu_custom_call.1} parent=1 // loop_footer_branch
      %16 = sbr.rel target = $region3
    $region8: #{tpu_custom_call.1} parent=1 // loop_exit
      _
    %1536 = vsyncpa [#allocation3], 1
    %s1537 = scalar_lea.sflag [#allocation3], 1
    %1538 = vsyncpa %s1537, 1
    %1539 = vsyncpa [#allocation6], 1
    %1540 = vsyncpa [#allocation4], 1
    %s1541 = scalar_lea.sflag [#allocation4], 1
    %1542 = vsyncpa %s1541, 1

</llo_original>
